<compile_context>
chip_gen: v6e
topology: v6e:2x2x1
jax: 0.10.0
libtpu: 0.0.40
codegen_flags: <defaults>
</compile_context>

<pallas_src>
import functools

import jax
import jax.numpy as jnp
from jax.experimental import pallas as pl
from jax.experimental.pallas import tpu as pltpu

C_IN, C_H1, C_H2, C_OUT = 768, 192, 64, 256
BN_EPS = 1e-5


def _refine3l_kernel(x_ref,
                     w1_ref, b1_ref,
                     w2_ref, b2_ref,
                     w3_ref, b3_ref,
                     o_ref):
    # x_ref: (768, tp) channel-major pixel tile (channels on sublanes,
    # pixels on lanes). Weights are (cout, cin) with BN pre-folded.
    x = x_ref[...]

    # conv1 (1x1) + folded BN1 + ReLU
    h = jnp.dot(w1_ref[...], x, preferred_element_type=jnp.float32) + b1_ref[...]
    h = jnp.maximum(h, 0.0)

    # conv2 (1x1) + folded BN2 + ReLU
    h = jnp.dot(w2_ref[...], h, preferred_element_type=jnp.float32) + b2_ref[...]
    h = jnp.maximum(h, 0.0)

    # conv3 (1x1), no activation
    o_ref[...] = (jnp.dot(w3_ref[...], h, preferred_element_type=jnp.float32)
                  + b3_ref[...]).astype(o_ref.dtype)


def _round_up(x, m):
    return ((x + m - 1) // m) * m


@functools.partial(jax.jit, static_argnames=("tp",))
def refine3l_forward(x_nchw, params, tp=1024):
    """x_nchw: (N, 768, H, W) float32 -> (N, 256, H, W) float32."""
    N, C, H, W = x_nchw.shape
    assert C == C_IN
    P = H * W

    # Channel-major pixel matrix: (N, C, P). No transpose, just a reshape.
    x = x_nchw.reshape(N, C_IN, P)

    (w1, b1, g1, be1, m1, v1,
     w2, b2, g2, be2, m2, v2,
     w3, b3) = params

    # Fold eval-mode BatchNorm into the conv weights/biases.
    #   BN(conv(x)) = (x*W^T + b - m) * s + beta, s = g / sqrt(v + eps)
    #             = x @ (W*s)^T + ((b - m)*s + beta)
    s1 = g1 * jax.lax.rsqrt(v1 + BN_EPS)
    s2 = g2 * jax.lax.rsqrt(v2 + BN_EPS)
    w1f = w1 * s1[:, None]                       # (192, 768)
    b1f = ((b1 - m1) * s1 + be1).reshape(C_H1, 1)
    w2f = w2 * s2[:, None]                       # (64, 192)
    b2f = ((b2 - m2) * s2 + be2).reshape(C_H2, 1)
    b3f = b3.reshape(C_OUT, 1)

    # Pixel tile: multiple of 128 lanes, clamped to problem size.
    tp = min(tp, _round_up(P, 128))
    grid = (N, pl.cdiv(P, tp))

    wmap = lambda n, p: (0, 0)   # weights/biases: same (whole) block every step

    out = pl.pallas_call(
        _refine3l_kernel,
        out_shape=jax.ShapeDtypeStruct((N, C_OUT, P), jnp.float32),
        grid_spec=pltpu.PrefetchScalarGridSpec(
            num_scalar_prefetch=0,
            grid=grid,
            in_specs=[
                pl.BlockSpec((None, C_IN, tp), lambda n, p: (n, 0, p)),
                pl.BlockSpec((C_H1, C_IN), wmap),
                pl.BlockSpec((C_H1, 1), wmap),
                pl.BlockSpec((C_H2, C_H1), wmap),
                pl.BlockSpec((C_H2, 1), wmap),
                pl.BlockSpec((C_OUT, C_H2), wmap),
                pl.BlockSpec((C_OUT, 1), wmap),
            ],
            out_specs=pl.BlockSpec((None, C_OUT, tp), lambda n, p: (n, 0, p)),
        ),
        compiler_params=pltpu.CompilerParams(
            dimension_semantics=("parallel", "parallel"),
            vmem_limit_bytes=32 * 1024 * 1024,
        ),
    )(x, w1f, b1f, w2f, b2f, w3, b3f)

    return out.reshape(N, C_OUT, H, W)


def init_params(key):
    ks = jax.random.split(key, 14)

    def w(k, cout, cin, scale):
        # PyTorch Conv2d layout: (cout, cin) for 1x1 conv
        return jax.random.normal(k, (cout, cin), jnp.float32) * scale

    w1 = w(ks[0], C_H1, C_IN, 0.02)
    b1 = jax.random.normal(ks[1], (C_H1,), jnp.float32) * 0.01
    g1 = 1.0 + 0.1 * jax.random.normal(ks[2], (C_H1,), jnp.float32)
    be1 = 0.1 * jax.random.normal(ks[3], (C_H1,), jnp.float32)
    m1 = 0.1 * jax.random.normal(ks[4], (C_H1,), jnp.float32)
    v1 = jnp.abs(jax.random.normal(ks[5], (C_H1,), jnp.float32)) + 0.5

    w2 = w(ks[6], C_H2, C_H1, 0.05)
    b2 = jax.random.normal(ks[7], (C_H2,), jnp.float32) * 0.01
    g2 = 1.0 + 0.1 * jax.random.normal(ks[8], (C_H2,), jnp.float32)
    be2 = 0.1 * jax.random.normal(ks[9], (C_H2,), jnp.float32)
    m2 = 0.1 * jax.random.normal(ks[10], (C_H2,), jnp.float32)
    v2 = jnp.abs(jax.random.normal(ks[11], (C_H2,), jnp.float32)) + 0.5

    w3 = w(ks[12], C_OUT, C_H2, 0.05)
    b3 = jax.random.normal(ks[13], (C_OUT,), jnp.float32) * 0.01
    return (w1, b1, g1, be1, m1, v1,
            w2, b2, g2, be2, m2, v2,
            w3, b3)


def reference_forward(x_nchw, params):
    """Pure-JAX reference (eval-mode BN), NCHW throughout."""
    (w1, b1, g1, be1, m1, v1,
     w2, b2, g2, be2, m2, v2,
     w3, b3) = params

    def bn(h, g, be, m, v):
        inv = 1.0 / jnp.sqrt(v + BN_EPS)
        return ((h - m[None, :, None, None]) * inv[None, :, None, None]
                * g[None, :, None, None] + be[None, :, None, None])

    h = jnp.einsum('oc,nchw->nohw', w1, x_nchw) + b1[None, :, None, None]
    h = jnp.maximum(bn(h, g1, be1, m1, v1), 0.0)
    h = jnp.einsum('oc,nchw->nohw', w2, h) + b2[None, :, None, None]
    h = jnp.maximum(bn(h, g2, be2, m2, v2), 0.0)
    h = jnp.einsum('oc,nchw->nohw', w3, h) + b3[None, :, None, None]
    return h


if __name__ == "__main__":
    key = jax.random.PRNGKey(0)
    k_x, k_p = jax.random.split(key)

    # Small example consistent with the module: N=2, C=768, H=W=16.
    x = jax.random.normal(k_x, (2, C_IN, 16, 16), jnp.float32)
    params = init_params(k_p)

    out = refine3l_forward(x, params)
    out = jax.block_until_ready(out)

    ref = reference_forward(x, params)
    assert out.shape == (2, C_OUT, 16, 16), out.shape
    assert jnp.allclose(out, ref, atol=1e-3, rtol=1e-3), \
        float(jnp.max(jnp.abs(out - ref)))

    print("KERNEL_OK")
</pallas_src>

<mosaic_0001>
module attributes {stable_mosaic.version = 11 : i64} {
  func.func @_refine3l_kernel(%arg0: i32, %arg1: i32, %arg2: memref<1x768x256xf32, #tpu.memory_space<vmem>>, %arg3: memref<192x768xf32, #tpu.memory_space<vmem>>, %arg4: memref<192x1xf32, #tpu.memory_space<vmem>>, %arg5: memref<64x192xf32, #tpu.memory_space<vmem>>, %arg6: memref<64x1xf32, #tpu.memory_space<vmem>>, %arg7: memref<256x64xf32, #tpu.memory_space<vmem>>, %arg8: memref<256x1xf32, #tpu.memory_space<vmem>>, %arg9: memref<1x256x256xf32, #tpu.memory_space<vmem>>) attributes {dimension_semantics = [#tpu.dimension_semantics<parallel>, #tpu.dimension_semantics<parallel>], iteration_bounds = array<i64: 2, 1>, scalar_prefetch = 0 : i64, scratch_operands = 0 : i64, tpu.core_type = #tpu.core_type<tc>, window_params = [{transform_indices = @transform_0, window_bounds = array<i64: 1, 768, 256>}, {pipeline_mode = #tpu.pipeline_mode<synchronous>, transform_indices = @transform_1, window_bounds = array<i64: 192, 768>}, {pipeline_mode = #tpu.pipeline_mode<synchronous>, transform_indices = @transform_2, window_bounds = array<i64: 192, 1>}, {pipeline_mode = #tpu.pipeline_mode<synchronous>, transform_indices = @transform_3, window_bounds = array<i64: 64, 192>}, {pipeline_mode = #tpu.pipeline_mode<synchronous>, transform_indices = @transform_4, window_bounds = array<i64: 64, 1>}, {pipeline_mode = #tpu.pipeline_mode<synchronous>, transform_indices = @transform_5, window_bounds = array<i64: 256, 64>}, {pipeline_mode = #tpu.pipeline_mode<synchronous>, transform_indices = @transform_6, window_bounds = array<i64: 256, 1>}, {transform_indices = @transform_7, window_bounds = array<i64: 1, 256, 256>}]} {
    %c0 = arith.constant 0 : index
    %c0_0 = arith.constant 0 : index
    %c0_1 = arith.constant 0 : index
    %0 = vector.load %arg2[%c0, %c0_0, %c0_1] : memref<1x768x256xf32, #tpu.memory_space<vmem>>, vector<1x768x256xf32>
    %1 = vector.shape_cast %0 : vector<1x768x256xf32> to vector<768x256xf32>
    %c0_2 = arith.constant 0 : index
    %c0_3 = arith.constant 0 : index
    %2 = vector.load %arg3[%c0_2, %c0_3] : memref<192x768xf32, #tpu.memory_space<vmem>>, vector<192x768xf32>
    %cst = arith.constant dense<0.000000e+00> : vector<192x256xf32>
    %3 = tpu.matmul %2, %1, %cst {dimension_numbers = #tpu.dot_dimension_numbers<[1], [0], [0], [1], [0, 0, 1, 1], [], []>} : vector<192x768xf32>, vector<768x256xf32>, vector<192x256xf32> -> vector<192x256xf32>
    %c0_4 = arith.constant 0 : index
    %c0_5 = arith.constant 0 : index
    %4 = vector.load %arg4[%c0_4, %c0_5] : memref<192x1xf32, #tpu.memory_space<vmem>>, vector<192x1xf32>
    %5 = vector.broadcast %4 : vector<192x1xf32> to vector<192x256xf32>
    %6 = arith.addf %3, %5 : vector<192x256xf32>
    %cst_6 = arith.constant 0.000000e+00 : f32
    %7 = vector.broadcast %cst_6 : f32 to vector<192x256xf32>
    %8 = arith.maximumf %6, %7 : vector<192x256xf32>
    %c0_7 = arith.constant 0 : index
    %c0_8 = arith.constant 0 : index
    %9 = vector.load %arg5[%c0_7, %c0_8] : memref<64x192xf32, #tpu.memory_space<vmem>>, vector<64x192xf32>
    %cst_9 = arith.constant dense<0.000000e+00> : vector<64x256xf32>
    %10 = tpu.matmul %9, %8, %cst_9 {dimension_numbers = #tpu.dot_dimension_numbers<[1], [0], [0], [1], [0, 0, 1, 1], [], []>} : vector<64x192xf32>, vector<192x256xf32>, vector<64x256xf32> -> vector<64x256xf32>
    %c0_10 = arith.constant 0 : index
    %c0_11 = arith.constant 0 : index
    %11 = vector.load %arg6[%c0_10, %c0_11] : memref<64x1xf32, #tpu.memory_space<vmem>>, vector<64x1xf32>
    %12 = vector.broadcast %11 : vector<64x1xf32> to vector<64x256xf32>
    %13 = arith.addf %10, %12 : vector<64x256xf32>
    %cst_12 = arith.constant 0.000000e+00 : f32
    %14 = vector.broadcast %cst_12 : f32 to vector<64x256xf32>
    %15 = arith.maximumf %13, %14 : vector<64x256xf32>
    %c0_13 = arith.constant 0 : index
    %c0_14 = arith.constant 0 : index
    %16 = vector.load %arg7[%c0_13, %c0_14] : memref<256x64xf32, #tpu.memory_space<vmem>>, vector<256x64xf32>
    %cst_15 = arith.constant dense<0.000000e+00> : vector<256x256xf32>
    %17 = tpu.matmul %16, %15, %cst_15 {dimension_numbers = #tpu.dot_dimension_numbers<[1], [0], [0], [1], [0, 0, 1, 1], [], []>} : vector<256x64xf32>, vector<64x256xf32>, vector<256x256xf32> -> vector<256x256xf32>
    %c0_16 = arith.constant 0 : index
    %c0_17 = arith.constant 0 : index
    %18 = vector.load %arg8[%c0_16, %c0_17] : memref<256x1xf32, #tpu.memory_space<vmem>>, vector<256x1xf32>
    %19 = vector.broadcast %18 : vector<256x1xf32> to vector<256x256xf32>
    %20 = arith.addf %17, %19 : vector<256x256xf32>
    %c0_18 = arith.constant 0 : index
    %c0_19 = arith.constant 0 : index
    %c0_20 = arith.constant 0 : index
    %21 = vector.load %arg9[%c0_18, %c0_19, %c0_20] : memref<1x256x256xf32, #tpu.memory_space<vmem>>, vector<1x256x256xf32>
    %22 = vector.shape_cast %21 : vector<1x256x256xf32> to vector<256x256xf32>
    %23 = vector.shape_cast %20 : vector<256x256xf32> to vector<1x256x256xf32>
    tpu.vector_store %arg9[%c0_18, %c0_19, %c0_20], %23 {strides = array<i32>} : memref<1x256x256xf32, #tpu.memory_space<vmem>>, vector<1x256x256xf32>,
    return
  }
  func.func @transform_0(%arg0: i32, %arg1: i32) -> (i32, i32, i32) {
    %c0_i32 = arith.constant 0 : i32
    %c0_i32_0 = arith.constant 0 : i32
    return %arg0, %c0_i32, %arg1 : i32, i32, i32
  }
  func.func @transform_1(%arg0: i32, %arg1: i32) -> (i32, i32) {
    %c0_i32 = arith.constant 0 : i32
    %c0_i32_0 = arith.constant 0 : i32
    %c0_i32_1 = arith.constant 0 : i32
    return %c0_i32, %c0_i32_0 : i32, i32
  }
  func.func @transform_2(%arg0: i32, %arg1: i32) -> (i32, i32) {
    %c0_i32 = arith.constant 0 : i32
    %c0_i32_0 = arith.constant 0 : i32
    %c0_i32_1 = arith.constant 0 : i32
    return %c0_i32, %c0_i32_0 : i32, i32
  }
  func.func @transform_3(%arg0: i32, %arg1: i32) -> (i32, i32) {
    %c0_i32 = arith.constant 0 : i32
    %c0_i32_0 = arith.constant 0 : i32
    %c0_i32_1 = arith.constant 0 : i32
    return %c0_i32, %c0_i32_0 : i32, i32
  }
  func.func @transform_4(%arg0: i32, %arg1: i32) -> (i32, i32) {
    %c0_i32 = arith.constant 0 : i32
    %c0_i32_0 = arith.constant 0 : i32
    %c0_i32_1 = arith.constant 0 : i32
    return %c0_i32, %c0_i32_0 : i32, i32
  }
  func.func @transform_5(%arg0: i32, %arg1: i32) -> (i32, i32) {
    %c0_i32 = arith.constant 0 : i32
    %c0_i32_0 = arith.constant 0 : i32
    %c0_i32_1 = arith.constant 0 : i32
    return %c0_i32, %c0_i32_0 : i32, i32
  }
  func.func @transform_6(%arg0: i32, %arg1: i32) -> (i32, i32) {
    %c0_i32 = arith.constant 0 : i32
    %c0_i32_0 = arith.constant 0 : i32
    %c0_i32_1 = arith.constant 0 : i32
    return %c0_i32, %c0_i32_0 : i32, i32
  }
  func.func @transform_7(%arg0: i32, %arg1: i32) -> (i32, i32, i32) {
    %c0_i32 = arith.constant 0 : i32
    %c0_i32_0 = arith.constant 0 : i32
    return %arg0, %c0_i32, %arg1 : i32, i32, i32
  }
}

</mosaic_0001>

<llo_original>
// kernel: refine3l_forward.1
$region0: #{refine3l_forward.1}
  #allocation0 [shape = 'u32[]', space=smem, size = 0x4, offset = 0x4, fixed_abs, tag = 'smem constant byte address 0x4 - core index']
  #allocation1 [shape = 'u32[144,128]{1,0:T(1,128)}', space=vmem, size = 0x12000, scoped, tag = 'internal scratch']
  %s0 = inlined_call_operand.vmem [shape: f32[2,768,256], index: 0, kind: input, shape index: {}]
  %s1 = inlined_call_operand.vmem [shape: f32[192,768], index: 1, kind: input, shape index: {}]
  %s2 = inlined_call_operand.vmem [shape: f32[192,1], index: 2, kind: input, shape index: {}]
  %s3 = inlined_call_operand.vmem [shape: f32[64,192], index: 3, kind: input, shape index: {}]
  %s4 = inlined_call_operand.vmem [shape: f32[64,1], index: 4, kind: input, shape index: {}]
  %s5 = inlined_call_operand.vmem [shape: f32[256,64], index: 5, kind: input, shape index: {}]
  %s6 = inlined_call_operand.vmem [shape: f32[256,1], index: 6, kind: input, shape index: {}]
  %s7 = inlined_call_operand.vmem [shape: f32[2,256,256], index: 7, kind: output, shape index: {}]
  %s8 = sld [smem:[#allocation0]]
  $region61: #{refine3l_forward.1} parent=0
    _
  %s10 = ssub.s32 1, %s8
  %s11 = scalar_select 0, %s10, %s8
  loop: start=0, step=1, limit=4
  $region2: #{refine3l_forward.1} parent=0 // loop_pre_header
    _
  $region3: #{refine3l_forward.1} parent=0 // loop_header
    %s13 = sphi 0, %s17
    %p14 = scmp.ge.s32.totalorder %s13, 4
    %s20 = sphi 0, %s32
    %s21 = sphi 0, %s28
    %s22 = sphi 0, %s20
    %s23 = sphi 0, %s21
    %s24 = sphi 0, %s22
    %s25 = sphi 0, %s23
    %s37 = sphi 0, %s39
    %s40 = sphi 0, %s37
    %s41 = sphi 0, %s40
    %s57 = sphi 0, %s41
    %s61 = sphi 0, %s61
    %s63 = sphi 0, %s61
    %s64 = sphi 0, %s63
    %s78 = sphi 0, %s64
    %s82 = sphi 0, %s82
    %s84 = sphi 0, %s82
    %s85 = sphi 0, %s84
    %s99 = sphi 0, %s85
    %s103 = sphi 0, %s103
    %s105 = sphi 0, %s103
    %s106 = sphi 0, %s105
    %s120 = sphi 0, %s106
    %s124 = sphi 0, %s124
    %s126 = sphi 0, %s124
    %s127 = sphi 0, %s126
    %s141 = sphi 0, %s127
    %s145 = sphi 0, %s145
    %s147 = sphi 0, %s145
    %s148 = sphi 0, %s147
    %s162 = sphi 0, %s148
    %s166 = sphi 0, %s166
    %s168 = sphi 0, %s166
    %s169 = sphi 0, %s168
    %s183 = sphi 0, %s169
    %s191 = sphi 0, %s193
    %s194 = sphi 0, %s191
    %s195 = sphi 0, %s194
    %s211 = sphi 0, %s195
  $region4: #{refine3l_forward.1} parent=0 // loop_header_branch
    %16 = sbr.rel (%p14) target = $region8
  $region5: #{refine3l_forward.1} parent=0 // loop_body
    %s18 = ssub.s32 %s13, 1
    %s19 = ssub.s32 %s13, 2
    %s26 = sadd.s32 1, %s21
    %p27 = scmp.ge.s32.totalorder %s26, 1
    %s28 = scalar_select %p27, 0, %s26
    %s29 = sadd.s32 1, %s20
    %s30 = scalar_select %p27, %s29, %s20
    %p31 = scmp.ge.s32.totalorder %s30, 2
    %s32 = scalar_select %p31, 0, %s30
    %s33 = ssub.s32 %s20, %s32
    %s34 = ssub.s32 %s21, %s28
    %s35 = sor.u32 %s33, %s34
    %p36 = scmp.eq.s32.totalorder %s35, 0
    %s38 = sadd.s32 %s37, 1
    %s39 = scalar_select %p36, %s37, %s38
    %p42 = pneg %p36
    %p43 = scmp.eq.s32.totalorder %s13, 1
    %p44 = por %p42, %p43
    %p45 = scmp.ne.s32.totalorder %s37, %s40
    %p46 = scmp.eq.s32.totalorder %s13, 0
    %p47 = por %p45, %p46
    %p48 = scmp.ne.s32.totalorder %s37, %s40
    %p49 = scmp.eq.s32.totalorder %s18, 1
    %p50 = por %p48, %p49
    %p51 = scmp.ne.s32.totalorder %s40, %s41
    %p52 = scmp.eq.s32.totalorder %s18, 0
    %p53 = por %p51, %p52
    %p54 = scmp.ne.s32.totalorder %s40, %s41
    %p55 = scmp.eq.s32.totalorder %s19, 1
    %p56 = por %p54, %p55
    %p58 = scmp.ne.s32.totalorder %s41, %s57
    %p59 = scmp.eq.s32.totalorder %s19, 0
    %p60 = por %p58, %p59
    %s62 = sadd.s32 %s61, 1
    %p65 = scmp.eq.s32.totalorder %s13, 1
    %p66 = scmp.ne.s32.totalorder %s61, %s63
    %p67 = scmp.eq.s32.totalorder %s13, 0
    %p68 = por %p66, %p67
    %p69 = scmp.ne.s32.totalorder %s61, %s63
    %p70 = scmp.eq.s32.totalorder %s18, 1
    %p71 = por %p69, %p70
    %p72 = scmp.ne.s32.totalorder %s63, %s64
    %p73 = scmp.eq.s32.totalorder %s18, 0
    %p74 = por %p72, %p73
    %p75 = scmp.ne.s32.totalorder %s63, %s64
    %p76 = scmp.eq.s32.totalorder %s19, 1
    %p77 = por %p75, %p76
    %p79 = scmp.ne.s32.totalorder %s64, %s78
    %p80 = scmp.eq.s32.totalorder %s19, 0
    %p81 = por %p79, %p80
    %s83 = sadd.s32 %s82, 1
    %p86 = scmp.eq.s32.totalorder %s13, 1
    %p87 = scmp.ne.s32.totalorder %s82, %s84
    %p88 = scmp.eq.s32.totalorder %s13, 0
    %p89 = por %p87, %p88
    %p90 = scmp.ne.s32.totalorder %s82, %s84
    %p91 = scmp.eq.s32.totalorder %s18, 1
    %p92 = por %p90, %p91
    %p93 = scmp.ne.s32.totalorder %s84, %s85
    %p94 = scmp.eq.s32.totalorder %s18, 0
    %p95 = por %p93, %p94
    %p96 = scmp.ne.s32.totalorder %s84, %s85
    %p97 = scmp.eq.s32.totalorder %s19, 1
    %p98 = por %p96, %p97
    %p100 = scmp.ne.s32.totalorder %s85, %s99
    %p101 = scmp.eq.s32.totalorder %s19, 0
    %p102 = por %p100, %p101
    %s104 = sadd.s32 %s103, 1
    %p107 = scmp.eq.s32.totalorder %s13, 1
    %p108 = scmp.ne.s32.totalorder %s103, %s105
    %p109 = scmp.eq.s32.totalorder %s13, 0
    %p110 = por %p108, %p109
    %p111 = scmp.ne.s32.totalorder %s103, %s105
    %p112 = scmp.eq.s32.totalorder %s18, 1
    %p113 = por %p111, %p112
    %p114 = scmp.ne.s32.totalorder %s105, %s106
    %p115 = scmp.eq.s32.totalorder %s18, 0
    %p116 = por %p114, %p115
    %p117 = scmp.ne.s32.totalorder %s105, %s106
    %p118 = scmp.eq.s32.totalorder %s19, 1
    %p119 = por %p117, %p118
    %p121 = scmp.ne.s32.totalorder %s106, %s120
    %p122 = scmp.eq.s32.totalorder %s19, 0
    %p123 = por %p121, %p122
    %s125 = sadd.s32 %s124, 1
    %p128 = scmp.eq.s32.totalorder %s13, 1
    %p129 = scmp.ne.s32.totalorder %s124, %s126
    %p130 = scmp.eq.s32.totalorder %s13, 0
    %p131 = por %p129, %p130
    %p132 = scmp.ne.s32.totalorder %s124, %s126
    %p133 = scmp.eq.s32.totalorder %s18, 1
    %p134 = por %p132, %p133
    %p135 = scmp.ne.s32.totalorder %s126, %s127
    %p136 = scmp.eq.s32.totalorder %s18, 0
    %p137 = por %p135, %p136
    %p138 = scmp.ne.s32.totalorder %s126, %s127
    %p139 = scmp.eq.s32.totalorder %s19, 1
    %p140 = por %p138, %p139
    %p142 = scmp.ne.s32.totalorder %s127, %s141
    %p143 = scmp.eq.s32.totalorder %s19, 0
    %p144 = por %p142, %p143
    %s146 = sadd.s32 %s145, 1
    %p149 = scmp.eq.s32.totalorder %s13, 1
    %p150 = scmp.ne.s32.totalorder %s145, %s147
    %p151 = scmp.eq.s32.totalorder %s13, 0
    %p152 = por %p150, %p151
    %p153 = scmp.ne.s32.totalorder %s145, %s147
    %p154 = scmp.eq.s32.totalorder %s18, 1
    %p155 = por %p153, %p154
    %p156 = scmp.ne.s32.totalorder %s147, %s148
    %p157 = scmp.eq.s32.totalorder %s18, 0
    %p158 = por %p156, %p157
    %p159 = scmp.ne.s32.totalorder %s147, %s148
    %p160 = scmp.eq.s32.totalorder %s19, 1
    %p161 = por %p159, %p160
    %p163 = scmp.ne.s32.totalorder %s148, %s162
    %p164 = scmp.eq.s32.totalorder %s19, 0
    %p165 = por %p163, %p164
    %s167 = sadd.s32 %s166, 1
    %p170 = scmp.eq.s32.totalorder %s13, 1
    %p171 = scmp.ne.s32.totalorder %s166, %s168
    %p172 = scmp.eq.s32.totalorder %s13, 0
    %p173 = por %p171, %p172
    %p174 = scmp.ne.s32.totalorder %s166, %s168
    %p175 = scmp.eq.s32.totalorder %s18, 1
    %p176 = por %p174, %p175
    %p177 = scmp.ne.s32.totalorder %s168, %s169
    %p178 = scmp.eq.s32.totalorder %s18, 0
    %p179 = por %p177, %p178
    %p180 = scmp.ne.s32.totalorder %s168, %s169
    %p181 = scmp.eq.s32.totalorder %s19, 1
    %p182 = por %p180, %p181
    %p184 = scmp.ne.s32.totalorder %s169, %s183
    %p185 = scmp.eq.s32.totalorder %s19, 0
    %p186 = por %p184, %p185
    %s187 = ssub.s32 %s20, %s32
    %s188 = ssub.s32 %s21, %s28
    %s189 = sor.u32 %s187, %s188
    %p190 = scmp.eq.s32.totalorder %s189, 0
    %s192 = sadd.s32 %s191, 1
    %s193 = scalar_select %p190, %s191, %s192
    %p196 = pneg %p190
    %p197 = scmp.eq.s32.totalorder %s13, 1
    %p198 = por %p196, %p197
    %p199 = scmp.ne.s32.totalorder %s191, %s194
    %p200 = scmp.eq.s32.totalorder %s13, 0
    %p201 = por %p199, %p200
    %p202 = scmp.ne.s32.totalorder %s191, %s194
    %p203 = scmp.eq.s32.totalorder %s18, 1
    %p204 = por %p202, %p203
    %p205 = scmp.ne.s32.totalorder %s194, %s195
    %p206 = scmp.eq.s32.totalorder %s18, 0
    %p207 = por %p205, %p206
    %p208 = scmp.ne.s32.totalorder %s194, %s195
    %p209 = scmp.eq.s32.totalorder %s19, 1
    %p210 = por %p208, %p209
    %p212 = scmp.ne.s32.totalorder %s195, %s211
    %p213 = scmp.eq.s32.totalorder %s19, 0
    %p214 = por %p212, %p213
    %p215 = scmp.le.s32.totalorder 1, %s13
    %p216 = scmp.lt.s32.totalorder %s13, 3
    %p217 = pnand %p215, %p216
    %p218 = pneg %p217
    // Predicated region
    $region9: #{refine3l_forward.1} parent=5 // pred_check
      _
    $region10: #{refine3l_forward.1} parent=5 // pred_check_branch
      %220 = sbr.rel (%p217) target = $region12
    $region11: #{refine3l_forward.1} parent=5 // pred_region
      %s221 = ssub.s32 %s13, 1
      // Predicated region
      $region13: #{refine3l_forward.1} parent=11 // pred_check
        %p222 = pneg %p74
      $region14: #{refine3l_forward.1} parent=11 // pred_check_branch
        %224 = sbr.rel (%p222) target = $region16
      $region15: #{refine3l_forward.1} parent=11 // pred_region
        _
      $region16: #{refine3l_forward.1} parent=11 // pred_fallthru
        _
      // Predicated region
      $region17: #{refine3l_forward.1} parent=11 // pred_check
        %p225 = pneg %p95
      $region18: #{refine3l_forward.1} parent=11 // pred_check_branch
        %227 = sbr.rel (%p225) target = $region20
      $region19: #{refine3l_forward.1} parent=11 // pred_region
        _
      $region20: #{refine3l_forward.1} parent=11 // pred_fallthru
        _
      // Predicated region
      $region21: #{refine3l_forward.1} parent=11 // pred_check
        %p228 = pneg %p116
      $region22: #{refine3l_forward.1} parent=11 // pred_check_branch
        %230 = sbr.rel (%p228) target = $region24
      $region23: #{refine3l_forward.1} parent=11 // pred_region
        _
      $region24: #{refine3l_forward.1} parent=11 // pred_fallthru
        _
      // Predicated region
      $region25: #{refine3l_forward.1} parent=11 // pred_check
        %p231 = pneg %p137
      $region26: #{refine3l_forward.1} parent=11 // pred_check_branch
        %233 = sbr.rel (%p231) target = $region28
      $region27: #{refine3l_forward.1} parent=11 // pred_region
        _
      $region28: #{refine3l_forward.1} parent=11 // pred_fallthru
        _
      // Predicated region
      $region29: #{refine3l_forward.1} parent=11 // pred_check
        %p234 = pneg %p158
      $region30: #{refine3l_forward.1} parent=11 // pred_check_branch
        %236 = sbr.rel (%p234) target = $region32
      $region31: #{refine3l_forward.1} parent=11 // pred_region
        _
      $region32: #{refine3l_forward.1} parent=11 // pred_fallthru
        _
      // Predicated region
      $region33: #{refine3l_forward.1} parent=11 // pred_check
        %p237 = pneg %p179
      $region34: #{refine3l_forward.1} parent=11 // pred_check_branch
        %239 = sbr.rel (%p237) target = $region36
      $region35: #{refine3l_forward.1} parent=11 // pred_region
        _
      $region36: #{refine3l_forward.1} parent=11 // pred_fallthru
        _
    $region12: #{refine3l_forward.1} parent=5 // pred_fallthru
      _
    %p240 = scmp.lt.s32.totalorder %s13, 2
    // Predicated region
    $region37: #{refine3l_forward.1} parent=5 // pred_check
      %p241 = pneg %p240
    $region38: #{refine3l_forward.1} parent=5 // pred_check_branch
      %243 = sbr.rel (%p241) target = $region40
    $region39: #{refine3l_forward.1} parent=5 // pred_region
      // Predicated region
      $region41: #{refine3l_forward.1} parent=39 // pred_check
        %p244 = pneg %p47
      $region42: #{refine3l_forward.1} parent=39 // pred_check_branch
        %246 = sbr.rel (%p244) target = $region44
      $region43: #{refine3l_forward.1} parent=39 // pred_region
        %s247 = smul.u32 2, %s21
        %p248 = scmp.lt.s32.totalorder %s20, 1
        %s249 = scalar_select %p248, %s20, 1
        %p250 = scmp.lt.s32.totalorder %s247, 1
        %s251 = scalar_select %p250, %s247, 1
        %s252 = smul.addr %s249, 192
        %s253 = sadd.s32 %s251, %s252
        %s254 = smul.addr %s253, 8
        %s255 = scalar_lea.vmem %s0, %s254
        %s256 = smul.u32 2, %s21
      $region44: #{refine3l_forward.1} parent=39 // pred_fallthru
        _
    $region40: #{refine3l_forward.1} parent=5 // pred_fallthru
      _
    %p257 = scmp.le.s32.totalorder 1, %s13
    %p258 = scmp.lt.s32.totalorder %s13, 3
    %p259 = pnand %p257, %p258
    %p260 = pneg %p259
    // Predicated region
    $region45: #{refine3l_forward.1} parent=5 // pred_check
      _
    $region46: #{refine3l_forward.1} parent=5 // pred_check_branch
      %262 = sbr.rel (%p259) target = $region48
    $region47: #{refine3l_forward.1} parent=5 // pred_region
      %s263 = ssub.s32 %s13, 1
      %s264 = smul.u32 2, %s23
      %p265 = scmp.lt.s32.totalorder %s22, 1
      %s266 = scalar_select %p265, %s22, 1
      %p267 = scmp.lt.s32.totalorder %s264, 1
      %s268 = scalar_select %p267, %s264, 1
      %s269 = smul.addr %s266, 192
      %s270 = sadd.s32 %s268, %s269
      %s271 = smul.addr %s270, 8
      %s272 = scalar_lea.vmem %s0, %s271
      %p273 = pneg %p53
      %p274 = pneg %p50
      %p275 = pneg %p74
      %p276 = pneg %p71
      %p277 = pneg %p95
      %p278 = pneg %p92
      %p279 = pneg %p116
      %p280 = pneg %p113
      %p281 = pneg %p137
      %p282 = pneg %p134
      %p283 = pneg %p158
      %p284 = pneg %p155
      %p285 = pneg %p179
      %p286 = pneg %p176
      %p287 = pneg %p207
      %p288 = pneg %p204
      %s289 = smul.u32 2, %s23
      %p290 = scmp.lt.s32.totalorder %s22, 1
      %s291 = scalar_select %p290, %s22, 1
      %p292 = scmp.lt.s32.totalorder %s289, 1
      %s293 = scalar_select %p292, %s289, 1
      %s294 = smul.addr %s291, 64
      %s295 = sadd.s32 %s293, %s294
      %s296 = smul.addr %s295, 8
      %s297 = scalar_lea.vmem %s7, %s296
      %s298 = smul.u32 2, %s23
      %p299 = scmp.lt.s32.totalorder %s22, 1
      %s300 = scalar_select %p299, %s22, 1
      %p301 = scmp.lt.s32.totalorder %s298, 1
      %s302 = scalar_select %p301, %s298, 1
      %s303 = smul.addr %s300, 192
      %s304 = sadd.s32 %s302, %s303
      %s305 = smul.addr %s304, 8
      %s306 = scalar_lea.vmem %s0, %s305
      %s307 = smul.u32 2, %s23
      %s308 = smul.u32 2, %s23
      %p309 = scmp.lt.s32.totalorder %s22, 1
      %s310 = scalar_select %p309, %s22, 1
      %p311 = scmp.lt.s32.totalorder %s308, 1
      %s312 = scalar_select %p311, %s308, 1
      %s313 = smul.addr %s310, 64
      %s314 = sadd.s32 %s312, %s313
      %s315 = smul.addr %s314, 8
      %s316 = scalar_lea.vmem %s7, %s315
      %s317 = smul.u32 2, %s23
      %v318 = vld [vmem:[%s306] sm:$0xff]
      %v319 = vld [vmem:[%s306 + $0x8] sm:$0xff]
      %v320 = vld [vmem:[%s306 + $0x10] sm:$0xff]
      %v321 = vld [vmem:[%s306 + $0x18] sm:$0xff]
      %v322 = vld [vmem:[%s306 + $0x20] sm:$0xff]
      %v323 = vld [vmem:[%s306 + $0x28] sm:$0xff]
      %v324 = vld [vmem:[%s306 + $0x30] sm:$0xff]
      %v325 = vld [vmem:[%s306 + $0x38] sm:$0xff]
      %v326 = vld [vmem:[%s306 + $0x40] sm:$0xff]
      %v327 = vld [vmem:[%s306 + $0x48] sm:$0xff]
      %v328 = vld [vmem:[%s306 + $0x50] sm:$0xff]
      %v329 = vld [vmem:[%s306 + $0x58] sm:$0xff]
      %v330 = vld [vmem:[%s306 + $0x60] sm:$0xff]
      %v331 = vld [vmem:[%s306 + $0x68] sm:$0xff]
      %v332 = vld [vmem:[%s306 + $0x70] sm:$0xff]
      %v333 = vld [vmem:[%s306 + $0x78] sm:$0xff]
      %v334 = vld [vmem:[%s306 + $0x80] sm:$0xff]
      %v335 = vld [vmem:[%s306 + $0x88] sm:$0xff]
      %v336 = vld [vmem:[%s306 + $0x90] sm:$0xff]
      %v337 = vld [vmem:[%s306 + $0x98] sm:$0xff]
      %v338 = vld [vmem:[%s306 + $0xa0] sm:$0xff]
      %v339 = vld [vmem:[%s306 + $0xa8] sm:$0xff]
      %v340 = vld [vmem:[%s306 + $0xb0] sm:$0xff]
      %v341 = vld [vmem:[%s306 + $0xb8] sm:$0xff]
      %v342 = vld [vmem:[%s306 + $0xc0] sm:$0xff]
      %v343 = vld [vmem:[%s306 + $0xc8] sm:$0xff]
      %v344 = vld [vmem:[%s306 + $0xd0] sm:$0xff]
      %v345 = vld [vmem:[%s306 + $0xd8] sm:$0xff]
      %v346 = vld [vmem:[%s306 + $0xe0] sm:$0xff]
      %v347 = vld [vmem:[%s306 + $0xe8] sm:$0xff]
      %v348 = vld [vmem:[%s306 + $0xf0] sm:$0xff]
      %v349 = vld [vmem:[%s306 + $0xf8] sm:$0xff]
      %v350 = vld [vmem:[%s306 + $0x100] sm:$0xff]
      %v351 = vld [vmem:[%s306 + $0x108] sm:$0xff]
      %v352 = vld [vmem:[%s306 + $0x110] sm:$0xff]
      %v353 = vld [vmem:[%s306 + $0x118] sm:$0xff]
      %v354 = vld [vmem:[%s306 + $0x120] sm:$0xff]
      %v355 = vld [vmem:[%s306 + $0x128] sm:$0xff]
      %v356 = vld [vmem:[%s306 + $0x130] sm:$0xff]
      %v357 = vld [vmem:[%s306 + $0x138] sm:$0xff]
      %v358 = vld [vmem:[%s306 + $0x140] sm:$0xff]
      %v359 = vld [vmem:[%s306 + $0x148] sm:$0xff]
      %v360 = vld [vmem:[%s306 + $0x150] sm:$0xff]
      %v361 = vld [vmem:[%s306 + $0x158] sm:$0xff]
      %v362 = vld [vmem:[%s306 + $0x160] sm:$0xff]
      %v363 = vld [vmem:[%s306 + $0x168] sm:$0xff]
      %v364 = vld [vmem:[%s306 + $0x170] sm:$0xff]
      %v365 = vld [vmem:[%s306 + $0x178] sm:$0xff]
      %v366 = vld [vmem:[%s306 + $0x180] sm:$0xff]
      %v367 = vld [vmem:[%s306 + $0x188] sm:$0xff]
      %v368 = vld [vmem:[%s306 + $0x190] sm:$0xff]
      %v369 = vld [vmem:[%s306 + $0x198] sm:$0xff]
      %v370 = vld [vmem:[%s306 + $0x1a0] sm:$0xff]
      %v371 = vld [vmem:[%s306 + $0x1a8] sm:$0xff]
      %v372 = vld [vmem:[%s306 + $0x1b0] sm:$0xff]
      %v373 = vld [vmem:[%s306 + $0x1b8] sm:$0xff]
      %v374 = vld [vmem:[%s306 + $0x1c0] sm:$0xff]
      %v375 = vld [vmem:[%s306 + $0x1c8] sm:$0xff]
      %v376 = vld [vmem:[%s306 + $0x1d0] sm:$0xff]
      %v377 = vld [vmem:[%s306 + $0x1d8] sm:$0xff]
      %v378 = vld [vmem:[%s306 + $0x1e0] sm:$0xff]
      %v379 = vld [vmem:[%s306 + $0x1e8] sm:$0xff]
      %v380 = vld [vmem:[%s306 + $0x1f0] sm:$0xff]
      %v381 = vld [vmem:[%s306 + $0x1f8] sm:$0xff]
      %v382 = vld [vmem:[%s306 + $0x200] sm:$0xff]
      %v383 = vld [vmem:[%s306 + $0x208] sm:$0xff]
      %v384 = vld [vmem:[%s306 + $0x210] sm:$0xff]
      %v385 = vld [vmem:[%s306 + $0x218] sm:$0xff]
      %v386 = vld [vmem:[%s306 + $0x220] sm:$0xff]
      %v387 = vld [vmem:[%s306 + $0x228] sm:$0xff]
      %v388 = vld [vmem:[%s306 + $0x230] sm:$0xff]
      %v389 = vld [vmem:[%s306 + $0x238] sm:$0xff]
      %v390 = vld [vmem:[%s306 + $0x240] sm:$0xff]
      %v391 = vld [vmem:[%s306 + $0x248] sm:$0xff]
      %v392 = vld [vmem:[%s306 + $0x250] sm:$0xff]
      %v393 = vld [vmem:[%s306 + $0x258] sm:$0xff]
      %v394 = vld [vmem:[%s306 + $0x260] sm:$0xff]
      %v395 = vld [vmem:[%s306 + $0x268] sm:$0xff]
      %v396 = vld [vmem:[%s306 + $0x270] sm:$0xff]
      %v397 = vld [vmem:[%s306 + $0x278] sm:$0xff]
      %v398 = vld [vmem:[%s306 + $0x280] sm:$0xff]
      %v399 = vld [vmem:[%s306 + $0x288] sm:$0xff]
      %v400 = vld [vmem:[%s306 + $0x290] sm:$0xff]
      %v401 = vld [vmem:[%s306 + $0x298] sm:$0xff]
      %v402 = vld [vmem:[%s306 + $0x2a0] sm:$0xff]
      %v403 = vld [vmem:[%s306 + $0x2a8] sm:$0xff]
      %v404 = vld [vmem:[%s306 + $0x2b0] sm:$0xff]
      %v405 = vld [vmem:[%s306 + $0x2b8] sm:$0xff]
      %v406 = vld [vmem:[%s306 + $0x2c0] sm:$0xff]
      %v407 = vld [vmem:[%s306 + $0x2c8] sm:$0xff]
      %v408 = vld [vmem:[%s306 + $0x2d0] sm:$0xff]
      %v409 = vld [vmem:[%s306 + $0x2d8] sm:$0xff]
      %v410 = vld [vmem:[%s306 + $0x2e0] sm:$0xff]
      %v411 = vld [vmem:[%s306 + $0x2e8] sm:$0xff]
      %v412 = vld [vmem:[%s306 + $0x2f0] sm:$0xff]
      %v413 = vld [vmem:[%s306 + $0x2f8] sm:$0xff]
      %v414 = vld [vmem:[%s306 + $0x300] sm:$0xff]
      %v415 = vld [vmem:[%s306 + $0x308] sm:$0xff]
      %v416 = vld [vmem:[%s306 + $0x310] sm:$0xff]
      %v417 = vld [vmem:[%s306 + $0x318] sm:$0xff]
      %v418 = vld [vmem:[%s306 + $0x320] sm:$0xff]
      %v419 = vld [vmem:[%s306 + $0x328] sm:$0xff]
      %v420 = vld [vmem:[%s306 + $0x330] sm:$0xff]
      %v421 = vld [vmem:[%s306 + $0x338] sm:$0xff]
      %v422 = vld [vmem:[%s306 + $0x340] sm:$0xff]
      %v423 = vld [vmem:[%s306 + $0x348] sm:$0xff]
      %v424 = vld [vmem:[%s306 + $0x350] sm:$0xff]
      %v425 = vld [vmem:[%s306 + $0x358] sm:$0xff]
      %v426 = vld [vmem:[%s306 + $0x360] sm:$0xff]
      %v427 = vld [vmem:[%s306 + $0x368] sm:$0xff]
      %v428 = vld [vmem:[%s306 + $0x370] sm:$0xff]
      %v429 = vld [vmem:[%s306 + $0x378] sm:$0xff]
      %v430 = vld [vmem:[%s306 + $0x380] sm:$0xff]
      %v431 = vld [vmem:[%s306 + $0x388] sm:$0xff]
      %v432 = vld [vmem:[%s306 + $0x390] sm:$0xff]
      %v433 = vld [vmem:[%s306 + $0x398] sm:$0xff]
      %v434 = vld [vmem:[%s306 + $0x3a0] sm:$0xff]
      %v435 = vld [vmem:[%s306 + $0x3a8] sm:$0xff]
      %v436 = vld [vmem:[%s306 + $0x3b0] sm:$0xff]
      %v437 = vld [vmem:[%s306 + $0x3b8] sm:$0xff]
      %v438 = vld [vmem:[%s306 + $0x3c0] sm:$0xff]
      %v439 = vld [vmem:[%s306 + $0x3c8] sm:$0xff]
      %v440 = vld [vmem:[%s306 + $0x3d0] sm:$0xff]
      %v441 = vld [vmem:[%s306 + $0x3d8] sm:$0xff]
      %v442 = vld [vmem:[%s306 + $0x3e0] sm:$0xff]
      %v443 = vld [vmem:[%s306 + $0x3e8] sm:$0xff]
      %v444 = vld [vmem:[%s306 + $0x3f0] sm:$0xff]
      %v445 = vld [vmem:[%s306 + $0x3f8] sm:$0xff]
      %v446 = vld [vmem:[%s306 + $0x400] sm:$0xff]
      %v447 = vld [vmem:[%s306 + $0x408] sm:$0xff]
      %v448 = vld [vmem:[%s306 + $0x410] sm:$0xff]
      %v449 = vld [vmem:[%s306 + $0x418] sm:$0xff]
      %v450 = vld [vmem:[%s306 + $0x420] sm:$0xff]
      %v451 = vld [vmem:[%s306 + $0x428] sm:$0xff]
      %v452 = vld [vmem:[%s306 + $0x430] sm:$0xff]
      %v453 = vld [vmem:[%s306 + $0x438] sm:$0xff]
      %v454 = vld [vmem:[%s306 + $0x440] sm:$0xff]
      %v455 = vld [vmem:[%s306 + $0x448] sm:$0xff]
      %v456 = vld [vmem:[%s306 + $0x450] sm:$0xff]
      %v457 = vld [vmem:[%s306 + $0x458] sm:$0xff]
      %v458 = vld [vmem:[%s306 + $0x460] sm:$0xff]
      %v459 = vld [vmem:[%s306 + $0x468] sm:$0xff]
      %v460 = vld [vmem:[%s306 + $0x470] sm:$0xff]
      %v461 = vld [vmem:[%s306 + $0x478] sm:$0xff]
      %v462 = vld [vmem:[%s306 + $0x480] sm:$0xff]
      %v463 = vld [vmem:[%s306 + $0x488] sm:$0xff]
      %v464 = vld [vmem:[%s306 + $0x490] sm:$0xff]
      %v465 = vld [vmem:[%s306 + $0x498] sm:$0xff]
      %v466 = vld [vmem:[%s306 + $0x4a0] sm:$0xff]
      %v467 = vld [vmem:[%s306 + $0x4a8] sm:$0xff]
      %v468 = vld [vmem:[%s306 + $0x4b0] sm:$0xff]
      %v469 = vld [vmem:[%s306 + $0x4b8] sm:$0xff]
      %v470 = vld [vmem:[%s306 + $0x4c0] sm:$0xff]
      %v471 = vld [vmem:[%s306 + $0x4c8] sm:$0xff]
      %v472 = vld [vmem:[%s306 + $0x4d0] sm:$0xff]
      %v473 = vld [vmem:[%s306 + $0x4d8] sm:$0xff]
      %v474 = vld [vmem:[%s306 + $0x4e0] sm:$0xff]
      %v475 = vld [vmem:[%s306 + $0x4e8] sm:$0xff]
      %v476 = vld [vmem:[%s306 + $0x4f0] sm:$0xff]
      %v477 = vld [vmem:[%s306 + $0x4f8] sm:$0xff]
      %v478 = vld [vmem:[%s306 + $0x500] sm:$0xff]
      %v479 = vld [vmem:[%s306 + $0x508] sm:$0xff]
      %v480 = vld [vmem:[%s306 + $0x510] sm:$0xff]
      %v481 = vld [vmem:[%s306 + $0x518] sm:$0xff]
      %v482 = vld [vmem:[%s306 + $0x520] sm:$0xff]
      %v483 = vld [vmem:[%s306 + $0x528] sm:$0xff]
      %v484 = vld [vmem:[%s306 + $0x530] sm:$0xff]
      %v485 = vld [vmem:[%s306 + $0x538] sm:$0xff]
      %v486 = vld [vmem:[%s306 + $0x540] sm:$0xff]
      %v487 = vld [vmem:[%s306 + $0x548] sm:$0xff]
      %v488 = vld [vmem:[%s306 + $0x550] sm:$0xff]
      %v489 = vld [vmem:[%s306 + $0x558] sm:$0xff]
      %v490 = vld [vmem:[%s306 + $0x560] sm:$0xff]
      %v491 = vld [vmem:[%s306 + $0x568] sm:$0xff]
      %v492 = vld [vmem:[%s306 + $0x570] sm:$0xff]
      %v493 = vld [vmem:[%s306 + $0x578] sm:$0xff]
      %v494 = vld [vmem:[%s306 + $0x580] sm:$0xff]
      %v495 = vld [vmem:[%s306 + $0x588] sm:$0xff]
      %v496 = vld [vmem:[%s306 + $0x590] sm:$0xff]
      %v497 = vld [vmem:[%s306 + $0x598] sm:$0xff]
      %v498 = vld [vmem:[%s306 + $0x5a0] sm:$0xff]
      %v499 = vld [vmem:[%s306 + $0x5a8] sm:$0xff]
      %v500 = vld [vmem:[%s306 + $0x5b0] sm:$0xff]
      %v501 = vld [vmem:[%s306 + $0x5b8] sm:$0xff]
      %v502 = vld [vmem:[%s306 + $0x5c0] sm:$0xff]
      %v503 = vld [vmem:[%s306 + $0x5c8] sm:$0xff]
      %v504 = vld [vmem:[%s306 + $0x5d0] sm:$0xff]
      %v505 = vld [vmem:[%s306 + $0x5d8] sm:$0xff]
      %v506 = vld [vmem:[%s306 + $0x5e0] sm:$0xff]
      %v507 = vld [vmem:[%s306 + $0x5e8] sm:$0xff]
      %v508 = vld [vmem:[%s306 + $0x5f0] sm:$0xff]
      %v509 = vld [vmem:[%s306 + $0x5f8] sm:$0xff]
      %v510 = vld [vmem:[%s1] sm:$0xff]
      %v511 = vld [vmem:[%s1 + $0x8] sm:$0xff]
      %v512 = vld [vmem:[%s1 + $0x10] sm:$0xff]
      %v513 = vld [vmem:[%s1 + $0x18] sm:$0xff]
      %v514 = vld [vmem:[%s1 + $0x20] sm:$0xff]
      %v515 = vld [vmem:[%s1 + $0x28] sm:$0xff]
      %v516 = vld [vmem:[%s1 + $0x30] sm:$0xff]
      %v517 = vld [vmem:[%s1 + $0x38] sm:$0xff]
      %v518 = vld [vmem:[%s1 + $0x40] sm:$0xff]
      %v519 = vld [vmem:[%s1 + $0x48] sm:$0xff]
      %v520 = vld [vmem:[%s1 + $0x50] sm:$0xff]
      %v521 = vld [vmem:[%s1 + $0x58] sm:$0xff]
      %v522 = vld [vmem:[%s1 + $0x60] sm:$0xff]
      %v523 = vld [vmem:[%s1 + $0x68] sm:$0xff]
      %v524 = vld [vmem:[%s1 + $0x70] sm:$0xff]
      %v525 = vld [vmem:[%s1 + $0x78] sm:$0xff]
      %v526 = vld [vmem:[%s1 + $0x80] sm:$0xff]
      %v527 = vld [vmem:[%s1 + $0x88] sm:$0xff]
      %v528 = vld [vmem:[%s1 + $0x90] sm:$0xff]
      %v529 = vld [vmem:[%s1 + $0x98] sm:$0xff]
      %v530 = vld [vmem:[%s1 + $0xa0] sm:$0xff]
      %v531 = vld [vmem:[%s1 + $0xa8] sm:$0xff]
      %v532 = vld [vmem:[%s1 + $0xb0] sm:$0xff]
      %v533 = vld [vmem:[%s1 + $0xb8] sm:$0xff]
      %v534 = vld [vmem:[%s1 + $0xc0] sm:$0xff]
      %v535 = vld [vmem:[%s1 + $0xc8] sm:$0xff]
      %v536 = vld [vmem:[%s1 + $0xd0] sm:$0xff]
      %v537 = vld [vmem:[%s1 + $0xd8] sm:$0xff]
      %v538 = vld [vmem:[%s1 + $0xe0] sm:$0xff]
      %v539 = vld [vmem:[%s1 + $0xe8] sm:$0xff]
      %v540 = vld [vmem:[%s1 + $0xf0] sm:$0xff]
      %v541 = vld [vmem:[%s1 + $0xf8] sm:$0xff]
      %v542 = vld [vmem:[%s1 + $0x100] sm:$0xff]
      %v543 = vld [vmem:[%s1 + $0x108] sm:$0xff]
      %v544 = vld [vmem:[%s1 + $0x110] sm:$0xff]
      %v545 = vld [vmem:[%s1 + $0x118] sm:$0xff]
      %v546 = vld [vmem:[%s1 + $0x120] sm:$0xff]
      %v547 = vld [vmem:[%s1 + $0x128] sm:$0xff]
      %v548 = vld [vmem:[%s1 + $0x130] sm:$0xff]
      %v549 = vld [vmem:[%s1 + $0x138] sm:$0xff]
      %v550 = vld [vmem:[%s1 + $0x140] sm:$0xff]
      %v551 = vld [vmem:[%s1 + $0x148] sm:$0xff]
      %v552 = vld [vmem:[%s1 + $0x150] sm:$0xff]
      %v553 = vld [vmem:[%s1 + $0x158] sm:$0xff]
      %v554 = vld [vmem:[%s1 + $0x160] sm:$0xff]
      %v555 = vld [vmem:[%s1 + $0x168] sm:$0xff]
      %v556 = vld [vmem:[%s1 + $0x170] sm:$0xff]
      %v557 = vld [vmem:[%s1 + $0x178] sm:$0xff]
      %v558 = vld [vmem:[%s1 + $0x180] sm:$0xff]
      %v559 = vld [vmem:[%s1 + $0x188] sm:$0xff]
      %v560 = vld [vmem:[%s1 + $0x190] sm:$0xff]
      %v561 = vld [vmem:[%s1 + $0x198] sm:$0xff]
      %v562 = vld [vmem:[%s1 + $0x1a0] sm:$0xff]
      %v563 = vld [vmem:[%s1 + $0x1a8] sm:$0xff]
      %v564 = vld [vmem:[%s1 + $0x1b0] sm:$0xff]
      %v565 = vld [vmem:[%s1 + $0x1b8] sm:$0xff]
      %v566 = vld [vmem:[%s1 + $0x1c0] sm:$0xff]
      %v567 = vld [vmem:[%s1 + $0x1c8] sm:$0xff]
      %v568 = vld [vmem:[%s1 + $0x1d0] sm:$0xff]
      %v569 = vld [vmem:[%s1 + $0x1d8] sm:$0xff]
      %v570 = vld [vmem:[%s1 + $0x1e0] sm:$0xff]
      %v571 = vld [vmem:[%s1 + $0x1e8] sm:$0xff]
      %v572 = vld [vmem:[%s1 + $0x1f0] sm:$0xff]
      %v573 = vld [vmem:[%s1 + $0x1f8] sm:$0xff]
      %v574 = vld [vmem:[%s1 + $0x200] sm:$0xff]
      %v575 = vld [vmem:[%s1 + $0x208] sm:$0xff]
      %v576 = vld [vmem:[%s1 + $0x210] sm:$0xff]
      %v577 = vld [vmem:[%s1 + $0x218] sm:$0xff]
      %v578 = vld [vmem:[%s1 + $0x220] sm:$0xff]
      %v579 = vld [vmem:[%s1 + $0x228] sm:$0xff]
      %v580 = vld [vmem:[%s1 + $0x230] sm:$0xff]
      %v581 = vld [vmem:[%s1 + $0x238] sm:$0xff]
      %v582 = vld [vmem:[%s1 + $0x240] sm:$0xff]
      %v583 = vld [vmem:[%s1 + $0x248] sm:$0xff]
      %v584 = vld [vmem:[%s1 + $0x250] sm:$0xff]
      %v585 = vld [vmem:[%s1 + $0x258] sm:$0xff]
      %v586 = vld [vmem:[%s1 + $0x260] sm:$0xff]
      %v587 = vld [vmem:[%s1 + $0x268] sm:$0xff]
      %v588 = vld [vmem:[%s1 + $0x270] sm:$0xff]
      %v589 = vld [vmem:[%s1 + $0x278] sm:$0xff]
      %v590 = vld [vmem:[%s1 + $0x280] sm:$0xff]
      %v591 = vld [vmem:[%s1 + $0x288] sm:$0xff]
      %v592 = vld [vmem:[%s1 + $0x290] sm:$0xff]
      %v593 = vld [vmem:[%s1 + $0x298] sm:$0xff]
      %v594 = vld [vmem:[%s1 + $0x2a0] sm:$0xff]
      %v595 = vld [vmem:[%s1 + $0x2a8] sm:$0xff]
      %v596 = vld [vmem:[%s1 + $0x2b0] sm:$0xff]
      %v597 = vld [vmem:[%s1 + $0x2b8] sm:$0xff]
      %v598 = vld [vmem:[%s1 + $0x2c0] sm:$0xff]
      %v599 = vld [vmem:[%s1 + $0x2c8] sm:$0xff]
      %v600 = vld [vmem:[%s1 + $0x2d0] sm:$0xff]
      %v601 = vld [vmem:[%s1 + $0x2d8] sm:$0xff]
      %v602 = vld [vmem:[%s1 + $0x2e0] sm:$0xff]
      %v603 = vld [vmem:[%s1 + $0x2e8] sm:$0xff]
      %v604 = vld [vmem:[%s1 + $0x2f0] sm:$0xff]
      %v605 = vld [vmem:[%s1 + $0x2f8] sm:$0xff]
      %v606 = vld [vmem:[%s1 + $0x300] sm:$0xff]
      %v607 = vld [vmem:[%s1 + $0x308] sm:$0xff]
      %v608 = vld [vmem:[%s1 + $0x310] sm:$0xff]
      %v609 = vld [vmem:[%s1 + $0x318] sm:$0xff]
      %v610 = vld [vmem:[%s1 + $0x320] sm:$0xff]
      %v611 = vld [vmem:[%s1 + $0x328] sm:$0xff]
      %v612 = vld [vmem:[%s1 + $0x330] sm:$0xff]
      %v613 = vld [vmem:[%s1 + $0x338] sm:$0xff]
      %v614 = vld [vmem:[%s1 + $0x340] sm:$0xff]
      %v615 = vld [vmem:[%s1 + $0x348] sm:$0xff]
      %v616 = vld [vmem:[%s1 + $0x350] sm:$0xff]
      %v617 = vld [vmem:[%s1 + $0x358] sm:$0xff]
      %v618 = vld [vmem:[%s1 + $0x360] sm:$0xff]
      %v619 = vld [vmem:[%s1 + $0x368] sm:$0xff]
      %v620 = vld [vmem:[%s1 + $0x370] sm:$0xff]
      %v621 = vld [vmem:[%s1 + $0x378] sm:$0xff]
      %v622 = vld [vmem:[%s1 + $0x380] sm:$0xff]
      %v623 = vld [vmem:[%s1 + $0x388] sm:$0xff]
      %v624 = vld [vmem:[%s1 + $0x390] sm:$0xff]
      %v625 = vld [vmem:[%s1 + $0x398] sm:$0xff]
      %v626 = vld [vmem:[%s1 + $0x3a0] sm:$0xff]
      %v627 = vld [vmem:[%s1 + $0x3a8] sm:$0xff]
      %v628 = vld [vmem:[%s1 + $0x3b0] sm:$0xff]
      %v629 = vld [vmem:[%s1 + $0x3b8] sm:$0xff]
      %v630 = vld [vmem:[%s1 + $0x3c0] sm:$0xff]
      %v631 = vld [vmem:[%s1 + $0x3c8] sm:$0xff]
      %v632 = vld [vmem:[%s1 + $0x3d0] sm:$0xff]
      %v633 = vld [vmem:[%s1 + $0x3d8] sm:$0xff]
      %v634 = vld [vmem:[%s1 + $0x3e0] sm:$0xff]
      %v635 = vld [vmem:[%s1 + $0x3e8] sm:$0xff]
      %v636 = vld [vmem:[%s1 + $0x3f0] sm:$0xff]
      %v637 = vld [vmem:[%s1 + $0x3f8] sm:$0xff]
      %v638 = vld [vmem:[%s1 + $0x400] sm:$0xff]
      %v639 = vld [vmem:[%s1 + $0x408] sm:$0xff]
      %v640 = vld [vmem:[%s1 + $0x410] sm:$0xff]
      %v641 = vld [vmem:[%s1 + $0x418] sm:$0xff]
      %v642 = vld [vmem:[%s1 + $0x420] sm:$0xff]
      %v643 = vld [vmem:[%s1 + $0x428] sm:$0xff]
      %v644 = vld [vmem:[%s1 + $0x430] sm:$0xff]
      %v645 = vld [vmem:[%s1 + $0x438] sm:$0xff]
      %v646 = vld [vmem:[%s1 + $0x440] sm:$0xff]
      %v647 = vld [vmem:[%s1 + $0x448] sm:$0xff]
      %v648 = vld [vmem:[%s1 + $0x450] sm:$0xff]
      %v649 = vld [vmem:[%s1 + $0x458] sm:$0xff]
      %v650 = vld [vmem:[%s1 + $0x460] sm:$0xff]
      %v651 = vld [vmem:[%s1 + $0x468] sm:$0xff]
      %v652 = vld [vmem:[%s1 + $0x470] sm:$0xff]
      %v653 = vld [vmem:[%s1 + $0x478] sm:$0xff]
      %v654 = vld [vmem:[%s2] sm:$0xff]
      %v655 = vld [vmem:[%s2 + $0x8] sm:$0xff]
      %v656 = vld [vmem:[%s2 + $0x10] sm:$0xff]
      %v657 = vld [vmem:[%s2 + $0x18] sm:$0xff]
      %v658 = vld [vmem:[%s2 + $0x20] sm:$0xff]
      %v659 = vld [vmem:[%s2 + $0x28] sm:$0xff]
      %v660 = vld [vmem:[%s2 + $0x30] sm:$0xff]
      %v661 = vld [vmem:[%s2 + $0x38] sm:$0xff]
      %v662 = vld [vmem:[%s2 + $0x40] sm:$0xff]
      %v663 = vld [vmem:[%s2 + $0x48] sm:$0xff]
      %v664 = vld [vmem:[%s2 + $0x50] sm:$0xff]
      %v665 = vld [vmem:[%s2 + $0x58] sm:$0xff]
      %v666 = vld [vmem:[%s2 + $0x60] sm:$0xff]
      %v667 = vld [vmem:[%s2 + $0x68] sm:$0xff]
      %v668 = vld [vmem:[%s2 + $0x70] sm:$0xff]
      %v669 = vld [vmem:[%s2 + $0x78] sm:$0xff]
      %v670 = vld [vmem:[%s2 + $0x80] sm:$0xff]
      %v671 = vld [vmem:[%s2 + $0x88] sm:$0xff]
      %v672 = vld [vmem:[%s2 + $0x90] sm:$0xff]
      %v673 = vld [vmem:[%s2 + $0x98] sm:$0xff]
      %v674 = vld [vmem:[%s2 + $0xa0] sm:$0xff]
      %v675 = vld [vmem:[%s2 + $0xa8] sm:$0xff]
      %v676 = vld [vmem:[%s2 + $0xb0] sm:$0xff]
      %v677 = vld [vmem:[%s2 + $0xb8] sm:$0xff]
      %679 = vset.pattern.permute.xlu0 0
      %680 = vperm.xlu0 %679, %v654
      %v681 = vpop.permute.xlu0 %680
      %684 = vset.pattern.permute.xlu0 0
      %685 = vperm.xlu0 %684, %v655
      %v686 = vpop.permute.xlu0 %685
      %689 = vset.pattern.permute.xlu0 0
      %690 = vperm.xlu0 %689, %v656
      %v691 = vpop.permute.xlu0 %690
      %694 = vset.pattern.permute.xlu0 0
      %695 = vperm.xlu0 %694, %v657
      %v696 = vpop.permute.xlu0 %695
      %699 = vset.pattern.permute.xlu0 0
      %700 = vperm.xlu0 %699, %v658
      %v701 = vpop.permute.xlu0 %700
      %704 = vset.pattern.permute.xlu0 0
      %705 = vperm.xlu0 %704, %v659
      %v706 = vpop.permute.xlu0 %705
      %709 = vset.pattern.permute.xlu0 0
      %710 = vperm.xlu0 %709, %v660
      %v711 = vpop.permute.xlu0 %710
      %714 = vset.pattern.permute.xlu0 0
      %715 = vperm.xlu0 %714, %v661
      %v716 = vpop.permute.xlu0 %715
      %719 = vset.pattern.permute.xlu0 0
      %720 = vperm.xlu0 %719, %v662
      %v721 = vpop.permute.xlu0 %720
      %724 = vset.pattern.permute.xlu0 0
      %725 = vperm.xlu0 %724, %v663
      %v726 = vpop.permute.xlu0 %725
      %729 = vset.pattern.permute.xlu0 0
      %730 = vperm.xlu0 %729, %v664
      %v731 = vpop.permute.xlu0 %730
      %734 = vset.pattern.permute.xlu0 0
      %735 = vperm.xlu0 %734, %v665
      %v736 = vpop.permute.xlu0 %735
      %739 = vset.pattern.permute.xlu0 0
      %740 = vperm.xlu0 %739, %v666
      %v741 = vpop.permute.xlu0 %740
      %744 = vset.pattern.permute.xlu0 0
      %745 = vperm.xlu0 %744, %v667
      %v746 = vpop.permute.xlu0 %745
      %749 = vset.pattern.permute.xlu0 0
      %750 = vperm.xlu0 %749, %v668
      %v751 = vpop.permute.xlu0 %750
      %754 = vset.pattern.permute.xlu0 0
      %755 = vperm.xlu0 %754, %v669
      %v756 = vpop.permute.xlu0 %755
      %759 = vset.pattern.permute.xlu0 0
      %760 = vperm.xlu0 %759, %v670
      %v761 = vpop.permute.xlu0 %760
      %764 = vset.pattern.permute.xlu0 0
      %765 = vperm.xlu0 %764, %v671
      %v766 = vpop.permute.xlu0 %765
      %769 = vset.pattern.permute.xlu0 0
      %770 = vperm.xlu0 %769, %v672
      %v771 = vpop.permute.xlu0 %770
      %774 = vset.pattern.permute.xlu0 0
      %775 = vperm.xlu0 %774, %v673
      %v776 = vpop.permute.xlu0 %775
      %779 = vset.pattern.permute.xlu0 0
      %780 = vperm.xlu0 %779, %v674
      %v781 = vpop.permute.xlu0 %780
      %784 = vset.pattern.permute.xlu0 0
      %785 = vperm.xlu0 %784, %v675
      %v786 = vpop.permute.xlu0 %785
      %789 = vset.pattern.permute.xlu0 0
      %790 = vperm.xlu0 %789, %v676
      %v791 = vpop.permute.xlu0 %790
      %794 = vset.pattern.permute.xlu0 0
      %795 = vperm.xlu0 %794, %v677
      %v796 = vpop.permute.xlu0 %795
      %798 = vmatprep.subr.mxu0 %v349
      %799 = vmatpush1.msra.mxu0 %v348
      %800 = vmatprep.subr.mxu0 %v347
      %801 = vmatpush1.msra.mxu0 %v346
      %802 = vmatprep.subr.mxu0 %v345
      %803 = vmatpush1.msra.mxu0 %v344
      %804 = vmatprep.subr.mxu0 %v343
      %805 = vmatpush1.msra.mxu0 %v342
      %806 = vmatprep.subr.mxu0 %v341
      %807 = vmatpush1.msra.mxu0 %v340
      %808 = vmatprep.subr.mxu0 %v339
      %809 = vmatpush1.msra.mxu0 %v338
      %810 = vmatprep.subr.mxu0 %v337
      %811 = vmatpush1.msra.mxu0 %v336
      %812 = vmatprep.subr.mxu0 %v335
      %813 = vmatpush1.msra.mxu0 %v334
      %814 = vmatprep.subr.mxu0 %v333
      %815 = vmatpush1.msra.mxu0 %v332
      %816 = vmatprep.subr.mxu0 %v331
      %817 = vmatpush1.msra.mxu0 %v330
      %818 = vmatprep.subr.mxu0 %v329
      %819 = vmatpush1.msra.mxu0 %v328
      %820 = vmatprep.subr.mxu0 %v327
      %821 = vmatpush1.msra.mxu0 %v326
      %822 = vmatprep.subr.mxu0 %v325
      %823 = vmatpush1.msra.mxu0 %v324
      %824 = vmatprep.subr.mxu0 %v323
      %825 = vmatpush1.msra.mxu0 %v322
      %826 = vmatprep.subr.mxu0 %v321
      %827 = vmatpush1.msra.mxu0 %v320
      %828 = vmatprep.subr.mxu0 %v319
      %829 = vmatpush1.msra.mxu0 %v318
      %830 = vmatprep.subr.mxu0 %v381
      %831 = vmatpush2.msra.mxu0 %v380
      %832 = vmatprep.subr.mxu0 %v379
      %833 = vmatpush2.msra.mxu0 %v378
      %834 = vmatprep.subr.mxu0 %v377
      %835 = vmatpush2.msra.mxu0 %v376
      %836 = vmatprep.subr.mxu0 %v375
      %837 = vmatpush2.msra.mxu0 %v374
      %838 = vmatprep.subr.mxu0 %v373
      %839 = vmatpush2.msra.mxu0 %v372
      %840 = vmatprep.subr.mxu0 %v371
      %841 = vmatpush2.msra.mxu0 %v370
      %842 = vmatprep.subr.mxu0 %v369
      %843 = vmatpush2.msra.mxu0 %v368
      %844 = vmatprep.subr.mxu0 %v367
      %845 = vmatpush2.msra.mxu0 %v366
      %846 = vmatprep.subr.mxu0 %v365
      %847 = vmatpush2.msra.mxu0 %v364
      %848 = vmatprep.subr.mxu0 %v363
      %849 = vmatpush2.msra.mxu0 %v362
      %850 = vmatprep.subr.mxu0 %v361
      %851 = vmatpush2.msra.mxu0 %v360
      %852 = vmatprep.subr.mxu0 %v359
      %853 = vmatpush2.msra.mxu0 %v358
      %854 = vmatprep.subr.mxu0 %v357
      %855 = vmatpush2.msra.mxu0 %v356
      %856 = vmatprep.subr.mxu0 %v355
      %857 = vmatpush2.msra.mxu0 %v354
      %858 = vmatprep.subr.mxu0 %v353
      %859 = vmatpush2.msra.mxu0 %v352
      %860 = vmatprep.subr.mxu0 %v351
      %861 = vmatpush2.msra.mxu0 %v350
      %862 = vmatprep.mubr.f32.mxu0 %v511
      %863 = vmatmul.mubr.f32.gmra.mxu0 %v510
      %v864 = vpop.f32.mrf.mxu0
      %v865 = vadd.f32 %v681, %v864
      %v866 = vpop.f32.mrf.mxu0
      %v867 = vadd.f32 %v681, %v866
      %868 = vmatprep.mubr.f32.mxu0 %v517
      %869 = vmatmul.mubr.f32.gmra.mxu0 %v516
      %v870 = vpop.f32.mrf.mxu0
      %v871 = vadd.f32 %v686, %v870
      %v872 = vpop.f32.mrf.mxu0
      %v873 = vadd.f32 %v686, %v872
      %874 = vmatprep.mubr.f32.mxu0 %v523
      %875 = vmatmul.mubr.f32.gmra.mxu0 %v522
      %v876 = vpop.f32.mrf.mxu0
      %v877 = vadd.f32 %v691, %v876
      %v878 = vpop.f32.mrf.mxu0
      %v879 = vadd.f32 %v691, %v878
      %880 = vmatprep.mubr.f32.mxu0 %v529
      %881 = vmatmul.mubr.f32.gmra.mxu0 %v528
      %v882 = vpop.f32.mrf.mxu0
      %v883 = vadd.f32 %v696, %v882
      %v884 = vpop.f32.mrf.mxu0
      %v885 = vadd.f32 %v696, %v884
      %886 = vmatprep.mubr.f32.mxu0 %v535
      %887 = vmatmul.mubr.f32.gmra.mxu0 %v534
      %v888 = vpop.f32.mrf.mxu0
      %v889 = vadd.f32 %v701, %v888
      %v890 = vpop.f32.mrf.mxu0
      %v891 = vadd.f32 %v701, %v890
      %892 = vmatprep.mubr.f32.mxu0 %v541
      %893 = vmatmul.mubr.f32.gmra.mxu0 %v540
      %v894 = vpop.f32.mrf.mxu0
      %v895 = vadd.f32 %v706, %v894
      %v896 = vpop.f32.mrf.mxu0
      %v897 = vadd.f32 %v706, %v896
      %898 = vmatprep.mubr.f32.mxu0 %v547
      %899 = vmatmul.mubr.f32.gmra.mxu0 %v546
      %v900 = vpop.f32.mrf.mxu0
      %v901 = vadd.f32 %v711, %v900
      %v902 = vpop.f32.mrf.mxu0
      %v903 = vadd.f32 %v711, %v902
      %904 = vmatprep.mubr.f32.mxu0 %v553
      %905 = vmatmul.mubr.f32.gmra.mxu0 %v552
      %v906 = vpop.f32.mrf.mxu0
      %v907 = vadd.f32 %v716, %v906
      %v908 = vpop.f32.mrf.mxu0
      %v909 = vadd.f32 %v716, %v908
      %910 = vmatprep.mubr.f32.mxu0 %v559
      %911 = vmatmul.mubr.f32.gmra.mxu0 %v558
      %v912 = vpop.f32.mrf.mxu0
      %v913 = vadd.f32 %v721, %v912
      %v914 = vpop.f32.mrf.mxu0
      %v915 = vadd.f32 %v721, %v914
      %916 = vmatprep.mubr.f32.mxu0 %v565
      %917 = vmatmul.mubr.f32.gmra.mxu0 %v564
      %v918 = vpop.f32.mrf.mxu0
      %v919 = vadd.f32 %v726, %v918
      %v920 = vpop.f32.mrf.mxu0
      %v921 = vadd.f32 %v726, %v920
      %922 = vmatprep.mubr.f32.mxu0 %v571
      %923 = vmatmul.mubr.f32.gmra.mxu0 %v570
      %v924 = vpop.f32.mrf.mxu0
      %v925 = vadd.f32 %v731, %v924
      %v926 = vpop.f32.mrf.mxu0
      %v927 = vadd.f32 %v731, %v926
      %928 = vmatprep.mubr.f32.mxu0 %v577
      %929 = vmatmul.mubr.f32.gmra.mxu0 %v576
      %v930 = vpop.f32.mrf.mxu0
      %v931 = vadd.f32 %v736, %v930
      %v932 = vpop.f32.mrf.mxu0
      %v933 = vadd.f32 %v736, %v932
      %934 = vmatprep.mubr.f32.mxu0 %v583
      %935 = vmatmul.mubr.f32.gmra.mxu0 %v582
      %v936 = vpop.f32.mrf.mxu0
      %v937 = vadd.f32 %v741, %v936
      %v938 = vpop.f32.mrf.mxu0
      %v939 = vadd.f32 %v741, %v938
      %940 = vmatprep.mubr.f32.mxu0 %v589
      %941 = vmatmul.mubr.f32.gmra.mxu0 %v588
      %v942 = vpop.f32.mrf.mxu0
      %v943 = vadd.f32 %v746, %v942
      %v944 = vpop.f32.mrf.mxu0
      %v945 = vadd.f32 %v746, %v944
      %946 = vmatprep.mubr.f32.mxu0 %v595
      %947 = vmatmul.mubr.f32.gmra.mxu0 %v594
      %v948 = vpop.f32.mrf.mxu0
      %v949 = vadd.f32 %v751, %v948
      %v950 = vpop.f32.mrf.mxu0
      %v951 = vadd.f32 %v751, %v950
      %952 = vmatprep.mubr.f32.mxu0 %v601
      %953 = vmatmul.mubr.f32.gmra.mxu0 %v600
      %v954 = vpop.f32.mrf.mxu0
      %v955 = vadd.f32 %v756, %v954
      %v956 = vpop.f32.mrf.mxu0
      %v957 = vadd.f32 %v756, %v956
      %958 = vmatprep.mubr.f32.mxu0 %v607
      %959 = vmatmul.mubr.f32.gmra.mxu0 %v606
      %v960 = vpop.f32.mrf.mxu0
      %v961 = vadd.f32 %v761, %v960
      %v962 = vpop.f32.mrf.mxu0
      %v963 = vadd.f32 %v761, %v962
      %964 = vmatprep.mubr.f32.mxu0 %v613
      %965 = vmatmul.mubr.f32.gmra.mxu0 %v612
      %v966 = vpop.f32.mrf.mxu0
      %v967 = vadd.f32 %v766, %v966
      %v968 = vpop.f32.mrf.mxu0
      %v969 = vadd.f32 %v766, %v968
      %970 = vmatprep.mubr.f32.mxu0 %v619
      %971 = vmatmul.mubr.f32.gmra.mxu0 %v618
      %v972 = vpop.f32.mrf.mxu0
      %v973 = vadd.f32 %v771, %v972
      %v974 = vpop.f32.mrf.mxu0
      %v975 = vadd.f32 %v771, %v974
      %976 = vmatprep.mubr.f32.mxu0 %v625
      %977 = vmatmul.mubr.f32.gmra.mxu0 %v624
      %v978 = vpop.f32.mrf.mxu0
      %v979 = vadd.f32 %v776, %v978
      %v980 = vpop.f32.mrf.mxu0
      %v981 = vadd.f32 %v776, %v980
      %982 = vmatprep.mubr.f32.mxu0 %v631
      %983 = vmatmul.mubr.f32.gmra.mxu0 %v630
      %v984 = vpop.f32.mrf.mxu0
      %v985 = vadd.f32 %v781, %v984
      %v986 = vpop.f32.mrf.mxu0
      %v987 = vadd.f32 %v781, %v986
      %988 = vmatprep.mubr.f32.mxu0 %v637
      %989 = vmatmul.mubr.f32.gmra.mxu0 %v636
      %v990 = vpop.f32.mrf.mxu0
      %v991 = vadd.f32 %v786, %v990
      %v992 = vpop.f32.mrf.mxu0
      %v993 = vadd.f32 %v786, %v992
      %994 = vmatprep.mubr.f32.mxu0 %v643
      %995 = vmatmul.mubr.f32.gmra.mxu0 %v642
      %v996 = vpop.f32.mrf.mxu0
      %v997 = vadd.f32 %v791, %v996
      %v998 = vpop.f32.mrf.mxu0
      %v999 = vadd.f32 %v791, %v998
      %1000 = vmatprep.mubr.f32.mxu0 %v649
      %1001 = vmatmul.mubr.f32.gmra.mxu0 %v648
      %v1002 = vpop.f32.mrf.mxu0
      %v1003 = vadd.f32 %v796, %v1002
      %v1004 = vpop.f32.mrf.mxu0
      %v1005 = vadd.f32 %v796, %v1004
      %1006 = vdwg.mxu0
      %1007 = vmatprep.subr.mxu0 %v413
      %1008 = vmatpush1.msra.mxu0 %v412
      %1009 = vmatprep.subr.mxu0 %v411
      %1010 = vmatpush1.msra.mxu0 %v410
      %1011 = vmatprep.subr.mxu0 %v409
      %1012 = vmatpush1.msra.mxu0 %v408
      %1013 = vmatprep.subr.mxu0 %v407
      %1014 = vmatpush1.msra.mxu0 %v406
      %1015 = vmatprep.subr.mxu0 %v405
      %1016 = vmatpush1.msra.mxu0 %v404
      %1017 = vmatprep.subr.mxu0 %v403
      %1018 = vmatpush1.msra.mxu0 %v402
      %1019 = vmatprep.subr.mxu0 %v401
      %1020 = vmatpush1.msra.mxu0 %v400
      %1021 = vmatprep.subr.mxu0 %v399
      %1022 = vmatpush1.msra.mxu0 %v398
      %1023 = vmatprep.subr.mxu0 %v397
      %1024 = vmatpush1.msra.mxu0 %v396
      %1025 = vmatprep.subr.mxu0 %v395
      %1026 = vmatpush1.msra.mxu0 %v394
      %1027 = vmatprep.subr.mxu0 %v393
      %1028 = vmatpush1.msra.mxu0 %v392
      %1029 = vmatprep.subr.mxu0 %v391
      %1030 = vmatpush1.msra.mxu0 %v390
      %1031 = vmatprep.subr.mxu0 %v389
      %1032 = vmatpush1.msra.mxu0 %v388
      %1033 = vmatprep.subr.mxu0 %v387
      %1034 = vmatpush1.msra.mxu0 %v386
      %1035 = vmatprep.subr.mxu0 %v385
      %1036 = vmatpush1.msra.mxu0 %v384
      %1037 = vmatprep.subr.mxu0 %v383
      %1038 = vmatpush1.msra.mxu0 %v382
      %1039 = vmatprep.subr.mxu0 %v445
      %1040 = vmatpush2.msra.mxu0 %v444
      %1041 = vmatprep.subr.mxu0 %v443
      %1042 = vmatpush2.msra.mxu0 %v442
      %1043 = vmatprep.subr.mxu0 %v441
      %1044 = vmatpush2.msra.mxu0 %v440
      %1045 = vmatprep.subr.mxu0 %v439
      %1046 = vmatpush2.msra.mxu0 %v438
      %1047 = vmatprep.subr.mxu0 %v437
      %1048 = vmatpush2.msra.mxu0 %v436
      %1049 = vmatprep.subr.mxu0 %v435
      %1050 = vmatpush2.msra.mxu0 %v434
      %1051 = vmatprep.subr.mxu0 %v433
      %1052 = vmatpush2.msra.mxu0 %v432
      %1053 = vmatprep.subr.mxu0 %v431
      %1054 = vmatpush2.msra.mxu0 %v430
      %1055 = vmatprep.subr.mxu0 %v429
      %1056 = vmatpush2.msra.mxu0 %v428
      %1057 = vmatprep.subr.mxu0 %v427
      %1058 = vmatpush2.msra.mxu0 %v426
      %1059 = vmatprep.subr.mxu0 %v425
      %1060 = vmatpush2.msra.mxu0 %v424
      %1061 = vmatprep.subr.mxu0 %v423
      %1062 = vmatpush2.msra.mxu0 %v422
      %1063 = vmatprep.subr.mxu0 %v421
      %1064 = vmatpush2.msra.mxu0 %v420
      %1065 = vmatprep.subr.mxu0 %v419
      %1066 = vmatpush2.msra.mxu0 %v418
      %1067 = vmatprep.subr.mxu0 %v417
      %1068 = vmatpush2.msra.mxu0 %v416
      %1069 = vmatprep.subr.mxu0 %v415
      %1070 = vmatpush2.msra.mxu0 %v414
      %1071 = vmatprep.mubr.f32.mxu0 %v513
      %1072 = vmatmul.mubr.f32.gmra.mxu0 %v512
      %v1073 = vpop.f32.mrf.mxu0
      %v1074 = vadd.f32 %v865, %v1073
      %v1075 = vpop.f32.mrf.mxu0
      %v1076 = vadd.f32 %v867, %v1075
      %1077 = vmatprep.mubr.f32.mxu0 %v519
      %1078 = vmatmul.mubr.f32.gmra.mxu0 %v518
      %v1079 = vpop.f32.mrf.mxu0
      %v1080 = vadd.f32 %v871, %v1079
      %v1081 = vpop.f32.mrf.mxu0
      %v1082 = vadd.f32 %v873, %v1081
      %1083 = vmatprep.mubr.f32.mxu0 %v525
      %1084 = vmatmul.mubr.f32.gmra.mxu0 %v524
      %v1085 = vpop.f32.mrf.mxu0
      %v1086 = vadd.f32 %v877, %v1085
      %v1087 = vpop.f32.mrf.mxu0
      %v1088 = vadd.f32 %v879, %v1087
      %1089 = vmatprep.mubr.f32.mxu0 %v531
      %1090 = vmatmul.mubr.f32.gmra.mxu0 %v530
      %v1091 = vpop.f32.mrf.mxu0
      %v1092 = vadd.f32 %v883, %v1091
      %v1093 = vpop.f32.mrf.mxu0
      %v1094 = vadd.f32 %v885, %v1093
      %1095 = vmatprep.mubr.f32.mxu0 %v537
      %1096 = vmatmul.mubr.f32.gmra.mxu0 %v536
      %v1097 = vpop.f32.mrf.mxu0
      %v1098 = vadd.f32 %v889, %v1097
      %v1099 = vpop.f32.mrf.mxu0
      %v1100 = vadd.f32 %v891, %v1099
      %1101 = vmatprep.mubr.f32.mxu0 %v543
      %1102 = vmatmul.mubr.f32.gmra.mxu0 %v542
      %v1103 = vpop.f32.mrf.mxu0
      %v1104 = vadd.f32 %v895, %v1103
      %v1105 = vpop.f32.mrf.mxu0
      %v1106 = vadd.f32 %v897, %v1105
      %1107 = vmatprep.mubr.f32.mxu0 %v549
      %1108 = vmatmul.mubr.f32.gmra.mxu0 %v548
      %v1109 = vpop.f32.mrf.mxu0
      %v1110 = vadd.f32 %v901, %v1109
      %v1111 = vpop.f32.mrf.mxu0
      %v1112 = vadd.f32 %v903, %v1111
      %1113 = vmatprep.mubr.f32.mxu0 %v555
      %1114 = vmatmul.mubr.f32.gmra.mxu0 %v554
      %v1115 = vpop.f32.mrf.mxu0
      %v1116 = vadd.f32 %v907, %v1115
      %v1117 = vpop.f32.mrf.mxu0
      %v1118 = vadd.f32 %v909, %v1117
      %1119 = vmatprep.mubr.f32.mxu0 %v561
      %1120 = vmatmul.mubr.f32.gmra.mxu0 %v560
      %v1121 = vpop.f32.mrf.mxu0
      %v1122 = vadd.f32 %v913, %v1121
      %v1123 = vpop.f32.mrf.mxu0
      %v1124 = vadd.f32 %v915, %v1123
      %1125 = vmatprep.mubr.f32.mxu0 %v567
      %1126 = vmatmul.mubr.f32.gmra.mxu0 %v566
      %v1127 = vpop.f32.mrf.mxu0
      %v1128 = vadd.f32 %v919, %v1127
      %v1129 = vpop.f32.mrf.mxu0
      %v1130 = vadd.f32 %v921, %v1129
      %1131 = vmatprep.mubr.f32.mxu0 %v573
      %1132 = vmatmul.mubr.f32.gmra.mxu0 %v572
      %v1133 = vpop.f32.mrf.mxu0
      %v1134 = vadd.f32 %v925, %v1133
      %v1135 = vpop.f32.mrf.mxu0
      %v1136 = vadd.f32 %v927, %v1135
      %1137 = vmatprep.mubr.f32.mxu0 %v579
      %1138 = vmatmul.mubr.f32.gmra.mxu0 %v578
      %v1139 = vpop.f32.mrf.mxu0
      %v1140 = vadd.f32 %v931, %v1139
      %v1141 = vpop.f32.mrf.mxu0
      %v1142 = vadd.f32 %v933, %v1141
      %1143 = vmatprep.mubr.f32.mxu0 %v585
      %1144 = vmatmul.mubr.f32.gmra.mxu0 %v584
      %v1145 = vpop.f32.mrf.mxu0
      %v1146 = vadd.f32 %v937, %v1145
      %v1147 = vpop.f32.mrf.mxu0
      %v1148 = vadd.f32 %v939, %v1147
      %1149 = vmatprep.mubr.f32.mxu0 %v591
      %1150 = vmatmul.mubr.f32.gmra.mxu0 %v590
      %v1151 = vpop.f32.mrf.mxu0
      %v1152 = vadd.f32 %v943, %v1151
      %v1153 = vpop.f32.mrf.mxu0
      %v1154 = vadd.f32 %v945, %v1153
      %1155 = vmatprep.mubr.f32.mxu0 %v597
      %1156 = vmatmul.mubr.f32.gmra.mxu0 %v596
      %v1157 = vpop.f32.mrf.mxu0
      %v1158 = vadd.f32 %v949, %v1157
      %v1159 = vpop.f32.mrf.mxu0
      %v1160 = vadd.f32 %v951, %v1159
      %1161 = vmatprep.mubr.f32.mxu0 %v603
      %1162 = vmatmul.mubr.f32.gmra.mxu0 %v602
      %v1163 = vpop.f32.mrf.mxu0
      %v1164 = vadd.f32 %v955, %v1163
      %v1165 = vpop.f32.mrf.mxu0
      %v1166 = vadd.f32 %v957, %v1165
      %1167 = vmatprep.mubr.f32.mxu0 %v609
      %1168 = vmatmul.mubr.f32.gmra.mxu0 %v608
      %v1169 = vpop.f32.mrf.mxu0
      %v1170 = vadd.f32 %v961, %v1169
      %v1171 = vpop.f32.mrf.mxu0
      %v1172 = vadd.f32 %v963, %v1171
      %1173 = vmatprep.mubr.f32.mxu0 %v615
      %1174 = vmatmul.mubr.f32.gmra.mxu0 %v614
      %v1175 = vpop.f32.mrf.mxu0
      %v1176 = vadd.f32 %v967, %v1175
      %v1177 = vpop.f32.mrf.mxu0
      %v1178 = vadd.f32 %v969, %v1177
      %1179 = vmatprep.mubr.f32.mxu0 %v621
      %1180 = vmatmul.mubr.f32.gmra.mxu0 %v620
      %v1181 = vpop.f32.mrf.mxu0
      %v1182 = vadd.f32 %v973, %v1181
      %v1183 = vpop.f32.mrf.mxu0
      %v1184 = vadd.f32 %v975, %v1183
      %1185 = vmatprep.mubr.f32.mxu0 %v627
      %1186 = vmatmul.mubr.f32.gmra.mxu0 %v626
      %v1187 = vpop.f32.mrf.mxu0
      %v1188 = vadd.f32 %v979, %v1187
      %v1189 = vpop.f32.mrf.mxu0
      %v1190 = vadd.f32 %v981, %v1189
      %1191 = vmatprep.mubr.f32.mxu0 %v633
      %1192 = vmatmul.mubr.f32.gmra.mxu0 %v632
      %v1193 = vpop.f32.mrf.mxu0
      %v1194 = vadd.f32 %v985, %v1193
      %v1195 = vpop.f32.mrf.mxu0
      %v1196 = vadd.f32 %v987, %v1195
      %1197 = vmatprep.mubr.f32.mxu0 %v639
      %1198 = vmatmul.mubr.f32.gmra.mxu0 %v638
      %v1199 = vpop.f32.mrf.mxu0
      %v1200 = vadd.f32 %v991, %v1199
      %v1201 = vpop.f32.mrf.mxu0
      %v1202 = vadd.f32 %v993, %v1201
      %1203 = vmatprep.mubr.f32.mxu0 %v645
      %1204 = vmatmul.mubr.f32.gmra.mxu0 %v644
      %v1205 = vpop.f32.mrf.mxu0
      %v1206 = vadd.f32 %v997, %v1205
      %v1207 = vpop.f32.mrf.mxu0
      %v1208 = vadd.f32 %v999, %v1207
      %1209 = vmatprep.mubr.f32.mxu0 %v651
      %1210 = vmatmul.mubr.f32.gmra.mxu0 %v650
      %v1211 = vpop.f32.mrf.mxu0
      %v1212 = vadd.f32 %v1003, %v1211
      %v1213 = vpop.f32.mrf.mxu0
      %v1214 = vadd.f32 %v1005, %v1213
      %1215 = vdwg.mxu0
      %1216 = vmatprep.subr.mxu0 %v477
      %1217 = vmatpush1.msra.mxu0 %v476
      %1218 = vmatprep.subr.mxu0 %v475
      %1219 = vmatpush1.msra.mxu0 %v474
      %1220 = vmatprep.subr.mxu0 %v473
      %1221 = vmatpush1.msra.mxu0 %v472
      %1222 = vmatprep.subr.mxu0 %v471
      %1223 = vmatpush1.msra.mxu0 %v470
      %1224 = vmatprep.subr.mxu0 %v469
      %1225 = vmatpush1.msra.mxu0 %v468
      %1226 = vmatprep.subr.mxu0 %v467
      %1227 = vmatpush1.msra.mxu0 %v466
      %1228 = vmatprep.subr.mxu0 %v465
      %1229 = vmatpush1.msra.mxu0 %v464
      %1230 = vmatprep.subr.mxu0 %v463
      %1231 = vmatpush1.msra.mxu0 %v462
      %1232 = vmatprep.subr.mxu0 %v461
      %1233 = vmatpush1.msra.mxu0 %v460
      %1234 = vmatprep.subr.mxu0 %v459
      %1235 = vmatpush1.msra.mxu0 %v458
      %1236 = vmatprep.subr.mxu0 %v457
      %1237 = vmatpush1.msra.mxu0 %v456
      %1238 = vmatprep.subr.mxu0 %v455
      %1239 = vmatpush1.msra.mxu0 %v454
      %1240 = vmatprep.subr.mxu0 %v453
      %1241 = vmatpush1.msra.mxu0 %v452
      %1242 = vmatprep.subr.mxu0 %v451
      %1243 = vmatpush1.msra.mxu0 %v450
      %1244 = vmatprep.subr.mxu0 %v449
      %1245 = vmatpush1.msra.mxu0 %v448
      %1246 = vmatprep.subr.mxu0 %v447
      %1247 = vmatpush1.msra.mxu0 %v446
      %1248 = vmatprep.subr.mxu0 %v509
      %1249 = vmatpush2.msra.mxu0 %v508
      %1250 = vmatprep.subr.mxu0 %v507
      %1251 = vmatpush2.msra.mxu0 %v506
      %1252 = vmatprep.subr.mxu0 %v505
      %1253 = vmatpush2.msra.mxu0 %v504
      %1254 = vmatprep.subr.mxu0 %v503
      %1255 = vmatpush2.msra.mxu0 %v502
      %1256 = vmatprep.subr.mxu0 %v501
      %1257 = vmatpush2.msra.mxu0 %v500
      %1258 = vmatprep.subr.mxu0 %v499
      %1259 = vmatpush2.msra.mxu0 %v498
      %1260 = vmatprep.subr.mxu0 %v497
      %1261 = vmatpush2.msra.mxu0 %v496
      %1262 = vmatprep.subr.mxu0 %v495
      %1263 = vmatpush2.msra.mxu0 %v494
      %1264 = vmatprep.subr.mxu0 %v493
      %1265 = vmatpush2.msra.mxu0 %v492
      %1266 = vmatprep.subr.mxu0 %v491
      %1267 = vmatpush2.msra.mxu0 %v490
      %1268 = vmatprep.subr.mxu0 %v489
      %1269 = vmatpush2.msra.mxu0 %v488
      %1270 = vmatprep.subr.mxu0 %v487
      %1271 = vmatpush2.msra.mxu0 %v486
      %1272 = vmatprep.subr.mxu0 %v485
      %1273 = vmatpush2.msra.mxu0 %v484
      %1274 = vmatprep.subr.mxu0 %v483
      %1275 = vmatpush2.msra.mxu0 %v482
      %1276 = vmatprep.subr.mxu0 %v481
      %1277 = vmatpush2.msra.mxu0 %v480
      %1278 = vmatprep.subr.mxu0 %v479
      %1279 = vmatpush2.msra.mxu0 %v478
      %1280 = vmatprep.mubr.f32.mxu0 %v515
      %1281 = vmatmul.mubr.f32.gmra.mxu0 %v514
      %v1282 = vpop.f32.mrf.mxu0
      %v1283 = vadd.f32 %v1074, %v1282
      %v1284 = vpop.f32.mrf.mxu0
      %v1285 = vadd.f32 %v1076, %v1284
      %1286 = vmatprep.mubr.f32.mxu0 %v521
      %1287 = vmatmul.mubr.f32.gmra.mxu0 %v520
      %v1288 = vpop.f32.mrf.mxu0
      %v1289 = vadd.f32 %v1080, %v1288
      %v1290 = vpop.f32.mrf.mxu0
      %v1291 = vadd.f32 %v1082, %v1290
      %1292 = vmatprep.mubr.f32.mxu0 %v527
      %1293 = vmatmul.mubr.f32.gmra.mxu0 %v526
      %v1294 = vpop.f32.mrf.mxu0
      %v1295 = vadd.f32 %v1086, %v1294
      %v1296 = vpop.f32.mrf.mxu0
      %v1297 = vadd.f32 %v1088, %v1296
      %1298 = vmatprep.mubr.f32.mxu0 %v533
      %1299 = vmatmul.mubr.f32.gmra.mxu0 %v532
      %v1300 = vpop.f32.mrf.mxu0
      %v1301 = vadd.f32 %v1092, %v1300
      %v1302 = vpop.f32.mrf.mxu0
      %v1303 = vadd.f32 %v1094, %v1302
      %1304 = vmatprep.mubr.f32.mxu0 %v539
      %1305 = vmatmul.mubr.f32.gmra.mxu0 %v538
      %v1306 = vpop.f32.mrf.mxu0
      %v1307 = vadd.f32 %v1098, %v1306
      %v1308 = vpop.f32.mrf.mxu0
      %v1309 = vadd.f32 %v1100, %v1308
      %1310 = vmatprep.mubr.f32.mxu0 %v545
      %1311 = vmatmul.mubr.f32.gmra.mxu0 %v544
      %v1312 = vpop.f32.mrf.mxu0
      %v1313 = vadd.f32 %v1104, %v1312
      %v1314 = vpop.f32.mrf.mxu0
      %v1315 = vadd.f32 %v1106, %v1314
      %1316 = vmatprep.mubr.f32.mxu0 %v551
      %1317 = vmatmul.mubr.f32.gmra.mxu0 %v550
      %v1318 = vpop.f32.mrf.mxu0
      %v1319 = vadd.f32 %v1110, %v1318
      %v1320 = vpop.f32.mrf.mxu0
      %v1321 = vadd.f32 %v1112, %v1320
      %1322 = vmatprep.mubr.f32.mxu0 %v557
      %1323 = vmatmul.mubr.f32.gmra.mxu0 %v556
      %v1324 = vpop.f32.mrf.mxu0
      %v1325 = vadd.f32 %v1116, %v1324
      %v1326 = vpop.f32.mrf.mxu0
      %v1327 = vadd.f32 %v1118, %v1326
      %1328 = vmatprep.mubr.f32.mxu0 %v563
      %1329 = vmatmul.mubr.f32.gmra.mxu0 %v562
      %v1330 = vpop.f32.mrf.mxu0
      %v1331 = vadd.f32 %v1122, %v1330
      %v1332 = vpop.f32.mrf.mxu0
      %v1333 = vadd.f32 %v1124, %v1332
      %1334 = vmatprep.mubr.f32.mxu0 %v569
      %1335 = vmatmul.mubr.f32.gmra.mxu0 %v568
      %v1336 = vpop.f32.mrf.mxu0
      %v1337 = vadd.f32 %v1128, %v1336
      %v1338 = vpop.f32.mrf.mxu0
      %v1339 = vadd.f32 %v1130, %v1338
      %1340 = vmatprep.mubr.f32.mxu0 %v575
      %1341 = vmatmul.mubr.f32.gmra.mxu0 %v574
      %v1342 = vpop.f32.mrf.mxu0
      %v1343 = vadd.f32 %v1134, %v1342
      %v1344 = vpop.f32.mrf.mxu0
      %v1345 = vadd.f32 %v1136, %v1344
      %1346 = vmatprep.mubr.f32.mxu0 %v581
      %1347 = vmatmul.mubr.f32.gmra.mxu0 %v580
      %v1348 = vpop.f32.mrf.mxu0
      %v1349 = vadd.f32 %v1140, %v1348
      %v1350 = vpop.f32.mrf.mxu0
      %v1351 = vadd.f32 %v1142, %v1350
      %1352 = vmatprep.mubr.f32.mxu0 %v587
      %1353 = vmatmul.mubr.f32.gmra.mxu0 %v586
      %v1354 = vpop.f32.mrf.mxu0
      %v1355 = vadd.f32 %v1146, %v1354
      %v1356 = vpop.f32.mrf.mxu0
      %v1357 = vadd.f32 %v1148, %v1356
      %1358 = vmatprep.mubr.f32.mxu0 %v593
      %1359 = vmatmul.mubr.f32.gmra.mxu0 %v592
      %v1360 = vpop.f32.mrf.mxu0
      %v1361 = vadd.f32 %v1152, %v1360
      %v1362 = vpop.f32.mrf.mxu0
      %v1363 = vadd.f32 %v1154, %v1362
      %1364 = vmatprep.mubr.f32.mxu0 %v599
      %1365 = vmatmul.mubr.f32.gmra.mxu0 %v598
      %v1366 = vpop.f32.mrf.mxu0
      %v1367 = vadd.f32 %v1158, %v1366
      %v1368 = vpop.f32.mrf.mxu0
      %v1369 = vadd.f32 %v1160, %v1368
      %1370 = vmatprep.mubr.f32.mxu0 %v605
      %1371 = vmatmul.mubr.f32.gmra.mxu0 %v604
      %v1372 = vpop.f32.mrf.mxu0
      %v1373 = vadd.f32 %v1164, %v1372
      %v1374 = vpop.f32.mrf.mxu0
      %v1375 = vadd.f32 %v1166, %v1374
      %1376 = vmatprep.mubr.f32.mxu0 %v611
      %1377 = vmatmul.mubr.f32.gmra.mxu0 %v610
      %v1378 = vpop.f32.mrf.mxu0
      %v1379 = vadd.f32 %v1170, %v1378
      %v1380 = vpop.f32.mrf.mxu0
      %v1381 = vadd.f32 %v1172, %v1380
      %1382 = vmatprep.mubr.f32.mxu0 %v617
      %1383 = vmatmul.mubr.f32.gmra.mxu0 %v616
      %v1384 = vpop.f32.mrf.mxu0
      %v1385 = vadd.f32 %v1176, %v1384
      %v1386 = vpop.f32.mrf.mxu0
      %v1387 = vadd.f32 %v1178, %v1386
      %1388 = vmatprep.mubr.f32.mxu0 %v623
      %1389 = vmatmul.mubr.f32.gmra.mxu0 %v622
      %v1390 = vpop.f32.mrf.mxu0
      %v1391 = vadd.f32 %v1182, %v1390
      %v1392 = vpop.f32.mrf.mxu0
      %v1393 = vadd.f32 %v1184, %v1392
      %1394 = vmatprep.mubr.f32.mxu0 %v629
      %1395 = vmatmul.mubr.f32.gmra.mxu0 %v628
      %v1396 = vpop.f32.mrf.mxu0
      %v1397 = vadd.f32 %v1188, %v1396
      %v1398 = vpop.f32.mrf.mxu0
      %v1399 = vadd.f32 %v1190, %v1398
      %1400 = vmatprep.mubr.f32.mxu0 %v635
      %1401 = vmatmul.mubr.f32.gmra.mxu0 %v634
      %v1402 = vpop.f32.mrf.mxu0
      %v1403 = vadd.f32 %v1194, %v1402
      %v1404 = vpop.f32.mrf.mxu0
      %v1405 = vadd.f32 %v1196, %v1404
      %1406 = vmatprep.mubr.f32.mxu0 %v641
      %1407 = vmatmul.mubr.f32.gmra.mxu0 %v640
      %v1408 = vpop.f32.mrf.mxu0
      %v1409 = vadd.f32 %v1200, %v1408
      %v1410 = vpop.f32.mrf.mxu0
      %v1411 = vadd.f32 %v1202, %v1410
      %1412 = vmatprep.mubr.f32.mxu0 %v647
      %1413 = vmatmul.mubr.f32.gmra.mxu0 %v646
      %v1414 = vpop.f32.mrf.mxu0
      %v1415 = vadd.f32 %v1206, %v1414
      %v1416 = vpop.f32.mrf.mxu0
      %v1417 = vadd.f32 %v1208, %v1416
      %1418 = vmatprep.mubr.f32.mxu0 %v653
      %1419 = vmatmul.mubr.f32.gmra.mxu0 %v652
      %v1420 = vpop.f32.mrf.mxu0
      %v1421 = vadd.f32 %v1212, %v1420
      %v1422 = vpop.f32.mrf.mxu0
      %v1423 = vadd.f32 %v1214, %v1422
      %1424 = vdwg.mxu0
      %v1425 = vmax.f32 %v1283, 0.0
      %v1426 = vmax.f32 %v1285, 0.0
      %v1427 = vmax.f32 %v1289, 0.0
      %v1428 = vmax.f32 %v1291, 0.0
      %v1429 = vmax.f32 %v1295, 0.0
      %v1430 = vmax.f32 %v1297, 0.0
      %v1431 = vmax.f32 %v1301, 0.0
      %v1432 = vmax.f32 %v1303, 0.0
      %v1433 = vmax.f32 %v1307, 0.0
      %v1434 = vmax.f32 %v1309, 0.0
      %v1435 = vmax.f32 %v1313, 0.0
      %v1436 = vmax.f32 %v1315, 0.0
      %v1437 = vmax.f32 %v1319, 0.0
      %v1438 = vmax.f32 %v1321, 0.0
      %v1439 = vmax.f32 %v1325, 0.0
      %v1440 = vmax.f32 %v1327, 0.0
      %v1441 = vmax.f32 %v1331, 0.0
      %v1442 = vmax.f32 %v1333, 0.0
      %v1443 = vmax.f32 %v1337, 0.0
      %v1444 = vmax.f32 %v1339, 0.0
      %v1445 = vmax.f32 %v1343, 0.0
      %v1446 = vmax.f32 %v1345, 0.0
      %v1447 = vmax.f32 %v1349, 0.0
      %v1448 = vmax.f32 %v1351, 0.0
      %v1449 = vmax.f32 %v1355, 0.0
      %v1450 = vmax.f32 %v1357, 0.0
      %v1451 = vmax.f32 %v1361, 0.0
      %v1452 = vmax.f32 %v1363, 0.0
      %v1453 = vmax.f32 %v1367, 0.0
      %v1454 = vmax.f32 %v1369, 0.0
      %v1455 = vmax.f32 %v1373, 0.0
      %v1456 = vmax.f32 %v1375, 0.0
      %v1457 = vmax.f32 %v1379, 0.0
      %v1458 = vmax.f32 %v1381, 0.0
      %v1459 = vmax.f32 %v1385, 0.0
      %v1460 = vmax.f32 %v1387, 0.0
      %v1461 = vmax.f32 %v1391, 0.0
      %v1462 = vmax.f32 %v1393, 0.0
      %v1463 = vmax.f32 %v1397, 0.0
      %v1464 = vmax.f32 %v1399, 0.0
      %v1465 = vmax.f32 %v1403, 0.0
      %v1466 = vmax.f32 %v1405, 0.0
      %v1467 = vmax.f32 %v1409, 0.0
      %v1468 = vmax.f32 %v1411, 0.0
      %v1469 = vmax.f32 %v1415, 0.0
      %v1470 = vmax.f32 %v1417, 0.0
      %v1471 = vmax.f32 %v1421, 0.0
      %v1472 = vmax.f32 %v1423, 0.0
      %v1473 = vld [vmem:[%s3] sm:$0xff]
      %v1474 = vld [vmem:[%s3 + $0x8] sm:$0xff]
      %v1475 = vld [vmem:[%s3 + $0x10] sm:$0xff]
      %v1476 = vld [vmem:[%s3 + $0x18] sm:$0xff]
      %v1477 = vld [vmem:[%s3 + $0x20] sm:$0xff]
      %v1478 = vld [vmem:[%s3 + $0x28] sm:$0xff]
      %v1479 = vld [vmem:[%s3 + $0x30] sm:$0xff]
      %v1480 = vld [vmem:[%s3 + $0x38] sm:$0xff]
      %v1481 = vld [vmem:[%s3 + $0x40] sm:$0xff]
      %v1482 = vld [vmem:[%s3 + $0x48] sm:$0xff]
      %v1483 = vld [vmem:[%s3 + $0x50] sm:$0xff]
      %v1484 = vld [vmem:[%s3 + $0x58] sm:$0xff]
      %v1485 = vld [vmem:[%s3 + $0x60] sm:$0xff]
      %v1486 = vld [vmem:[%s3 + $0x68] sm:$0xff]
      %v1487 = vld [vmem:[%s3 + $0x70] sm:$0xff]
      %v1488 = vld [vmem:[%s3 + $0x78] sm:$0xff]
      %v1489 = vld [vmem:[%s4] sm:$0xff]
      %v1490 = vld [vmem:[%s4 + $0x8] sm:$0xff]
      %v1491 = vld [vmem:[%s4 + $0x10] sm:$0xff]
      %v1492 = vld [vmem:[%s4 + $0x18] sm:$0xff]
      %v1493 = vld [vmem:[%s4 + $0x20] sm:$0xff]
      %v1494 = vld [vmem:[%s4 + $0x28] sm:$0xff]
      %v1495 = vld [vmem:[%s4 + $0x30] sm:$0xff]
      %v1496 = vld [vmem:[%s4 + $0x38] sm:$0xff]
      %1498 = vset.pattern.permute.xlu0 0
      %1499 = vperm.xlu0 %1498, %v1489
      %v1500 = vpop.permute.xlu0 %1499
      %1503 = vset.pattern.permute.xlu0 0
      %1504 = vperm.xlu0 %1503, %v1490
      %v1505 = vpop.permute.xlu0 %1504
      %1508 = vset.pattern.permute.xlu0 0
      %1509 = vperm.xlu0 %1508, %v1491
      %v1510 = vpop.permute.xlu0 %1509
      %1513 = vset.pattern.permute.xlu0 0
      %1514 = vperm.xlu0 %1513, %v1492
      %v1515 = vpop.permute.xlu0 %1514
      %1518 = vset.pattern.permute.xlu0 0
      %1519 = vperm.xlu0 %1518, %v1493
      %v1520 = vpop.permute.xlu0 %1519
      %1523 = vset.pattern.permute.xlu0 0
      %1524 = vperm.xlu0 %1523, %v1494
      %v1525 = vpop.permute.xlu0 %1524
      %1528 = vset.pattern.permute.xlu0 0
      %1529 = vperm.xlu0 %1528, %v1495
      %v1530 = vpop.permute.xlu0 %1529
      %1533 = vset.pattern.permute.xlu0 0
      %1534 = vperm.xlu0 %1533, %v1496
      %v1535 = vpop.permute.xlu0 %1534
      %vm1537 = vcmask 523264
      %v1539 = vsel %vm1537, %v1474, 0
      %v1542 = vsel %vm1537, %v1476, 0
      %v1545 = vsel %vm1537, %v1478, 0
      %v1548 = vsel %vm1537, %v1480, 0
      %v1551 = vsel %vm1537, %v1482, 0
      %v1554 = vsel %vm1537, %v1484, 0
      %v1557 = vsel %vm1537, %v1486, 0
      %v1560 = vsel %vm1537, %v1488, 0
      %1562 = vmatprep.subr.mxu0 %v1456
      %1563 = vmatpush1.msra.mxu0 %v1455
      %1564 = vmatprep.subr.mxu0 %v1454
      %1565 = vmatpush1.msra.mxu0 %v1453
      %1566 = vmatprep.subr.mxu0 %v1452
      %1567 = vmatpush1.msra.mxu0 %v1451
      %1568 = vmatprep.subr.mxu0 %v1450
      %1569 = vmatpush1.msra.mxu0 %v1449
      %1570 = vmatprep.subr.mxu0 %v1448
      %1571 = vmatpush1.msra.mxu0 %v1447
      %1572 = vmatprep.subr.mxu0 %v1446
      %1573 = vmatpush1.msra.mxu0 %v1445
      %1574 = vmatprep.subr.mxu0 %v1444
      %1575 = vmatpush1.msra.mxu0 %v1443
      %1576 = vmatprep.subr.mxu0 %v1442
      %1577 = vmatpush1.msra.mxu0 %v1441
      %1578 = vmatprep.subr.mxu0 %v1440
      %1579 = vmatpush1.msra.mxu0 %v1439
      %1580 = vmatprep.subr.mxu0 %v1438
      %1581 = vmatpush1.msra.mxu0 %v1437
      %1582 = vmatprep.subr.mxu0 %v1436
      %1583 = vmatpush1.msra.mxu0 %v1435
      %1584 = vmatprep.subr.mxu0 %v1434
      %1585 = vmatpush1.msra.mxu0 %v1433
      %1586 = vmatprep.subr.mxu0 %v1432
      %1587 = vmatpush1.msra.mxu0 %v1431
      %1588 = vmatprep.subr.mxu0 %v1430
      %1589 = vmatpush1.msra.mxu0 %v1429
      %1590 = vmatprep.subr.mxu0 %v1428
      %1591 = vmatpush1.msra.mxu0 %v1427
      %1592 = vmatprep.subr.mxu0 %v1426
      %1593 = vmatpush1.msra.mxu0 %v1425
      %1594 = vmatprep.subr.mxu0 0.0
      %1595 = vmatpush2.msra.mxu0 0.0
      %1596 = vmatprep.subr.mxu0 0.0
      %1597 = vmatpush2.msra.mxu0 0.0
      %1598 = vmatprep.subr.mxu0 0.0
      %1599 = vmatpush2.msra.mxu0 0.0
      %1600 = vmatprep.subr.mxu0 0.0
      %1601 = vmatpush2.msra.mxu0 0.0
      %1602 = vmatprep.subr.mxu0 0.0
      %1603 = vmatpush2.msra.mxu0 0.0
      %1604 = vmatprep.subr.mxu0 0.0
      %1605 = vmatpush2.msra.mxu0 0.0
      %1606 = vmatprep.subr.mxu0 0.0
      %1607 = vmatpush2.msra.mxu0 0.0
      %1608 = vmatprep.subr.mxu0 0.0
      %1609 = vmatpush2.msra.mxu0 0.0
      %1610 = vmatprep.subr.mxu0 %v1472
      %1611 = vmatpush2.msra.mxu0 %v1471
      %1612 = vmatprep.subr.mxu0 %v1470
      %1613 = vmatpush2.msra.mxu0 %v1469
      %1614 = vmatprep.subr.mxu0 %v1468
      %1615 = vmatpush2.msra.mxu0 %v1467
      %1616 = vmatprep.subr.mxu0 %v1466
      %1617 = vmatpush2.msra.mxu0 %v1465
      %1618 = vmatprep.subr.mxu0 %v1464
      %1619 = vmatpush2.msra.mxu0 %v1463
      %1620 = vmatprep.subr.mxu0 %v1462
      %1621 = vmatpush2.msra.mxu0 %v1461
      %1622 = vmatprep.subr.mxu0 %v1460
      %1623 = vmatpush2.msra.mxu0 %v1459
      %1624 = vmatprep.subr.mxu0 %v1458
      %1625 = vmatpush2.msra.mxu0 %v1457
      %1626 = vmatprep.mubr.f32.mxu0 %v1539
      %1627 = vmatmul.mubr.f32.gmra.mxu0 %v1473
      %v1628 = vpop.f32.mrf.mxu0
      %v1629 = vadd.f32 %v1500, %v1628
      %v1630 = vpop.f32.mrf.mxu0
      %v1631 = vadd.f32 %v1500, %v1630
      %1632 = vmatprep.mubr.f32.mxu0 %v1542
      %1633 = vmatmul.mubr.f32.gmra.mxu0 %v1475
      %v1634 = vpop.f32.mrf.mxu0
      %v1635 = vadd.f32 %v1505, %v1634
      %v1636 = vpop.f32.mrf.mxu0
      %v1637 = vadd.f32 %v1505, %v1636
      %1638 = vmatprep.mubr.f32.mxu0 %v1545
      %1639 = vmatmul.mubr.f32.gmra.mxu0 %v1477
      %v1640 = vpop.f32.mrf.mxu0
      %v1641 = vadd.f32 %v1510, %v1640
      %v1642 = vpop.f32.mrf.mxu0
      %v1643 = vadd.f32 %v1510, %v1642
      %1644 = vmatprep.mubr.f32.mxu0 %v1548
      %1645 = vmatmul.mubr.f32.gmra.mxu0 %v1479
      %v1646 = vpop.f32.mrf.mxu0
      %v1647 = vadd.f32 %v1515, %v1646
      %v1648 = vpop.f32.mrf.mxu0
      %v1649 = vadd.f32 %v1515, %v1648
      %1650 = vmatprep.mubr.f32.mxu0 %v1551
      %1651 = vmatmul.mubr.f32.gmra.mxu0 %v1481
      %v1652 = vpop.f32.mrf.mxu0
      %v1653 = vadd.f32 %v1520, %v1652
      %v1654 = vpop.f32.mrf.mxu0
      %v1655 = vadd.f32 %v1520, %v1654
      %1656 = vmatprep.mubr.f32.mxu0 %v1554
      %1657 = vmatmul.mubr.f32.gmra.mxu0 %v1483
      %v1658 = vpop.f32.mrf.mxu0
      %v1659 = vadd.f32 %v1525, %v1658
      %v1660 = vpop.f32.mrf.mxu0
      %v1661 = vadd.f32 %v1525, %v1660
      %1662 = vmatprep.mubr.f32.mxu0 %v1557
      %1663 = vmatmul.mubr.f32.gmra.mxu0 %v1485
      %v1664 = vpop.f32.mrf.mxu0
      %v1665 = vadd.f32 %v1530, %v1664
      %v1666 = vpop.f32.mrf.mxu0
      %v1667 = vadd.f32 %v1530, %v1666
      %1668 = vmatprep.mubr.f32.mxu0 %v1560
      %1669 = vmatmul.mubr.f32.gmra.mxu0 %v1487
      %v1670 = vpop.f32.mrf.mxu0
      %v1671 = vadd.f32 %v1535, %v1670
      %v1672 = vpop.f32.mrf.mxu0
      %v1673 = vadd.f32 %v1535, %v1672
      %1674 = vdwg.mxu0
      %v1675 = vmax.f32 %v1629, 0.0
      %v1676 = vmax.f32 %v1631, 0.0
      %v1677 = vmax.f32 %v1635, 0.0
      %v1678 = vmax.f32 %v1637, 0.0
      %v1679 = vmax.f32 %v1641, 0.0
      %v1680 = vmax.f32 %v1643, 0.0
      %v1681 = vmax.f32 %v1647, 0.0
      %v1682 = vmax.f32 %v1649, 0.0
      %v1683 = vmax.f32 %v1653, 0.0
      %v1684 = vmax.f32 %v1655, 0.0
      %v1685 = vmax.f32 %v1659, 0.0
      %v1686 = vmax.f32 %v1661, 0.0
      %v1687 = vmax.f32 %v1665, 0.0
      %v1688 = vmax.f32 %v1667, 0.0
      %v1689 = vmax.f32 %v1671, 0.0
      %v1690 = vmax.f32 %v1673, 0.0
      %v1691 = vld [vmem:[%s5] sm:$0xff]
      %v1692 = vld [vmem:[%s5 + $0x8] sm:$0xff]
      %v1693 = vld [vmem:[%s5 + $0x10] sm:$0xff]
      %v1694 = vld [vmem:[%s5 + $0x18] sm:$0xff]
      %v1695 = vld [vmem:[%s5 + $0x20] sm:$0xff]
      %v1696 = vld [vmem:[%s5 + $0x28] sm:$0xff]
      %v1697 = vld [vmem:[%s5 + $0x30] sm:$0xff]
      %v1698 = vld [vmem:[%s5 + $0x38] sm:$0xff]
      %v1699 = vld [vmem:[%s5 + $0x40] sm:$0xff]
      %v1700 = vld [vmem:[%s5 + $0x48] sm:$0xff]
      %v1701 = vld [vmem:[%s5 + $0x50] sm:$0xff]
      %v1702 = vld [vmem:[%s5 + $0x58] sm:$0xff]
      %v1703 = vld [vmem:[%s5 + $0x60] sm:$0xff]
      %v1704 = vld [vmem:[%s5 + $0x68] sm:$0xff]
      %v1705 = vld [vmem:[%s5 + $0x70] sm:$0xff]
      %v1706 = vld [vmem:[%s5 + $0x78] sm:$0xff]
      %v1707 = vld [vmem:[%s5 + $0x80] sm:$0xff]
      %v1708 = vld [vmem:[%s5 + $0x88] sm:$0xff]
      %v1709 = vld [vmem:[%s5 + $0x90] sm:$0xff]
      %v1710 = vld [vmem:[%s5 + $0x98] sm:$0xff]
      %v1711 = vld [vmem:[%s5 + $0xa0] sm:$0xff]
      %v1712 = vld [vmem:[%s5 + $0xa8] sm:$0xff]
      %v1713 = vld [vmem:[%s5 + $0xb0] sm:$0xff]
      %v1714 = vld [vmem:[%s5 + $0xb8] sm:$0xff]
      %v1715 = vld [vmem:[%s5 + $0xc0] sm:$0xff]
      %v1716 = vld [vmem:[%s5 + $0xc8] sm:$0xff]
      %v1717 = vld [vmem:[%s5 + $0xd0] sm:$0xff]
      %v1718 = vld [vmem:[%s5 + $0xd8] sm:$0xff]
      %v1719 = vld [vmem:[%s5 + $0xe0] sm:$0xff]
      %v1720 = vld [vmem:[%s5 + $0xe8] sm:$0xff]
      %v1721 = vld [vmem:[%s5 + $0xf0] sm:$0xff]
      %v1722 = vld [vmem:[%s5 + $0xf8] sm:$0xff]
      %v1723 = vld [vmem:[%s6] sm:$0xff]
      %v1724 = vld [vmem:[%s6 + $0x8] sm:$0xff]
      %v1725 = vld [vmem:[%s6 + $0x10] sm:$0xff]
      %v1726 = vld [vmem:[%s6 + $0x18] sm:$0xff]
      %v1727 = vld [vmem:[%s6 + $0x20] sm:$0xff]
      %v1728 = vld [vmem:[%s6 + $0x28] sm:$0xff]
      %v1729 = vld [vmem:[%s6 + $0x30] sm:$0xff]
      %v1730 = vld [vmem:[%s6 + $0x38] sm:$0xff]
      %v1731 = vld [vmem:[%s6 + $0x40] sm:$0xff]
      %v1732 = vld [vmem:[%s6 + $0x48] sm:$0xff]
      %v1733 = vld [vmem:[%s6 + $0x50] sm:$0xff]
      %v1734 = vld [vmem:[%s6 + $0x58] sm:$0xff]
      %v1735 = vld [vmem:[%s6 + $0x60] sm:$0xff]
      %v1736 = vld [vmem:[%s6 + $0x68] sm:$0xff]
      %v1737 = vld [vmem:[%s6 + $0x70] sm:$0xff]
      %v1738 = vld [vmem:[%s6 + $0x78] sm:$0xff]
      %v1739 = vld [vmem:[%s6 + $0x80] sm:$0xff]
      %v1740 = vld [vmem:[%s6 + $0x88] sm:$0xff]
      %v1741 = vld [vmem:[%s6 + $0x90] sm:$0xff]
      %v1742 = vld [vmem:[%s6 + $0x98] sm:$0xff]
      %v1743 = vld [vmem:[%s6 + $0xa0] sm:$0xff]
      %v1744 = vld [vmem:[%s6 + $0xa8] sm:$0xff]
      %v1745 = vld [vmem:[%s6 + $0xb0] sm:$0xff]
      %v1746 = vld [vmem:[%s6 + $0xb8] sm:$0xff]
      %v1747 = vld [vmem:[%s6 + $0xc0] sm:$0xff]
      %v1748 = vld [vmem:[%s6 + $0xc8] sm:$0xff]
      %v1749 = vld [vmem:[%s6 + $0xd0] sm:$0xff]
      %v1750 = vld [vmem:[%s6 + $0xd8] sm:$0xff]
      %v1751 = vld [vmem:[%s6 + $0xe0] sm:$0xff]
      %v1752 = vld [vmem:[%s6 + $0xe8] sm:$0xff]
      %v1753 = vld [vmem:[%s6 + $0xf0] sm:$0xff]
      %v1754 = vld [vmem:[%s6 + $0xf8] sm:$0xff]
      %1756 = vset.pattern.permute.xlu0 0
      %1757 = vperm.xlu0 %1756, %v1723
      %v1758 = vpop.permute.xlu0 %1757
      %1761 = vset.pattern.permute.xlu0 0
      %1762 = vperm.xlu0 %1761, %v1724
      %v1763 = vpop.permute.xlu0 %1762
      %1766 = vset.pattern.permute.xlu0 0
      %1767 = vperm.xlu0 %1766, %v1725
      %v1768 = vpop.permute.xlu0 %1767
      %1771 = vset.pattern.permute.xlu0 0
      %1772 = vperm.xlu0 %1771, %v1726
      %v1773 = vpop.permute.xlu0 %1772
      %1776 = vset.pattern.permute.xlu0 0
      %1777 = vperm.xlu0 %1776, %v1727
      %v1778 = vpop.permute.xlu0 %1777
      %1781 = vset.pattern.permute.xlu0 0
      %1782 = vperm.xlu0 %1781, %v1728
      %v1783 = vpop.permute.xlu0 %1782
      %1786 = vset.pattern.permute.xlu0 0
      %1787 = vperm.xlu0 %1786, %v1729
      %v1788 = vpop.permute.xlu0 %1787
      %1791 = vset.pattern.permute.xlu0 0
      %1792 = vperm.xlu0 %1791, %v1730
      %v1793 = vpop.permute.xlu0 %1792
      %1796 = vset.pattern.permute.xlu0 0
      %1797 = vperm.xlu0 %1796, %v1731
      %v1798 = vpop.permute.xlu0 %1797
      %1801 = vset.pattern.permute.xlu0 0
      %1802 = vperm.xlu0 %1801, %v1732
      %v1803 = vpop.permute.xlu0 %1802
      %1806 = vset.pattern.permute.xlu0 0
      %1807 = vperm.xlu0 %1806, %v1733
      %v1808 = vpop.permute.xlu0 %1807
      %1811 = vset.pattern.permute.xlu0 0
      %1812 = vperm.xlu0 %1811, %v1734
      %v1813 = vpop.permute.xlu0 %1812
      %1816 = vset.pattern.permute.xlu0 0
      %1817 = vperm.xlu0 %1816, %v1735
      %v1818 = vpop.permute.xlu0 %1817
      %1821 = vset.pattern.permute.xlu0 0
      %1822 = vperm.xlu0 %1821, %v1736
      %v1823 = vpop.permute.xlu0 %1822
      %1826 = vset.pattern.permute.xlu0 0
      %1827 = vperm.xlu0 %1826, %v1737
      %v1828 = vpop.permute.xlu0 %1827
      %1831 = vset.pattern.permute.xlu0 0
      %1832 = vperm.xlu0 %1831, %v1738
      %v1833 = vpop.permute.xlu0 %1832
      %1836 = vset.pattern.permute.xlu0 0
      %1837 = vperm.xlu0 %1836, %v1739
      %v1838 = vpop.permute.xlu0 %1837
      %1841 = vset.pattern.permute.xlu0 0
      %1842 = vperm.xlu0 %1841, %v1740
      %v1843 = vpop.permute.xlu0 %1842
      %1846 = vset.pattern.permute.xlu0 0
      %1847 = vperm.xlu0 %1846, %v1741
      %v1848 = vpop.permute.xlu0 %1847
      %1851 = vset.pattern.permute.xlu0 0
      %1852 = vperm.xlu0 %1851, %v1742
      %v1853 = vpop.permute.xlu0 %1852
      %1856 = vset.pattern.permute.xlu0 0
      %1857 = vperm.xlu0 %1856, %v1743
      %v1858 = vpop.permute.xlu0 %1857
      %1861 = vset.pattern.permute.xlu0 0
      %1862 = vperm.xlu0 %1861, %v1744
      %v1863 = vpop.permute.xlu0 %1862
      %1866 = vset.pattern.permute.xlu0 0
      %1867 = vperm.xlu0 %1866, %v1745
      %v1868 = vpop.permute.xlu0 %1867
      %1871 = vset.pattern.permute.xlu0 0
      %1872 = vperm.xlu0 %1871, %v1746
      %v1873 = vpop.permute.xlu0 %1872
      %1876 = vset.pattern.permute.xlu0 0
      %1877 = vperm.xlu0 %1876, %v1747
      %v1878 = vpop.permute.xlu0 %1877
      %1881 = vset.pattern.permute.xlu0 0
      %1882 = vperm.xlu0 %1881, %v1748
      %v1883 = vpop.permute.xlu0 %1882
      %1886 = vset.pattern.permute.xlu0 0
      %1887 = vperm.xlu0 %1886, %v1749
      %v1888 = vpop.permute.xlu0 %1887
      %1891 = vset.pattern.permute.xlu0 0
      %1892 = vperm.xlu0 %1891, %v1750
      %v1893 = vpop.permute.xlu0 %1892
      %1896 = vset.pattern.permute.xlu0 0
      %1897 = vperm.xlu0 %1896, %v1751
      %v1898 = vpop.permute.xlu0 %1897
      %1901 = vset.pattern.permute.xlu0 0
      %1902 = vperm.xlu0 %1901, %v1752
      %v1903 = vpop.permute.xlu0 %1902
      %1906 = vset.pattern.permute.xlu0 0
      %1907 = vperm.xlu0 %1906, %v1753
      %v1908 = vpop.permute.xlu0 %1907
      %1911 = vset.pattern.permute.xlu0 0
      %1912 = vperm.xlu0 %1911, %v1754
      %v1913 = vpop.permute.xlu0 %1912
      %v1916 = vsel %vm1537, %v1691, 0
      %v1919 = vsel %vm1537, %v1692, 0
      %v1922 = vsel %vm1537, %v1693, 0
      %v1925 = vsel %vm1537, %v1694, 0
      %v1928 = vsel %vm1537, %v1695, 0
      %v1931 = vsel %vm1537, %v1696, 0
      %v1934 = vsel %vm1537, %v1697, 0
      %v1937 = vsel %vm1537, %v1698, 0
      %v1940 = vsel %vm1537, %v1699, 0
      %v1943 = vsel %vm1537, %v1700, 0
      %v1946 = vsel %vm1537, %v1701, 0
      %v1949 = vsel %vm1537, %v1702, 0
      %v1952 = vsel %vm1537, %v1703, 0
      %v1955 = vsel %vm1537, %v1704, 0
      %v1958 = vsel %vm1537, %v1705, 0
      %v1961 = vsel %vm1537, %v1706, 0
      %v1964 = vsel %vm1537, %v1707, 0
      %v1967 = vsel %vm1537, %v1708, 0
      %v1970 = vsel %vm1537, %v1709, 0
      %v1973 = vsel %vm1537, %v1710, 0
      %v1976 = vsel %vm1537, %v1711, 0
      %v1979 = vsel %vm1537, %v1712, 0
      %v1982 = vsel %vm1537, %v1713, 0
      %v1985 = vsel %vm1537, %v1714, 0
      %v1988 = vsel %vm1537, %v1715, 0
      %v1991 = vsel %vm1537, %v1716, 0
      %v1994 = vsel %vm1537, %v1717, 0
      %v1997 = vsel %vm1537, %v1718, 0
      %v2000 = vsel %vm1537, %v1719, 0
      %v2003 = vsel %vm1537, %v1720, 0
      %v2006 = vsel %vm1537, %v1721, 0
      %v2009 = vsel %vm1537, %v1722, 0
      %2011 = vmatprep.subr.mxu0 0.0
      %2012 = vmatpush1.msra.mxu0 0.0
      %2013 = vmatprep.subr.mxu0 0.0
      %2014 = vmatpush1.msra.mxu0 0.0
      %2015 = vmatprep.subr.mxu0 0.0
      %2016 = vmatpush1.msra.mxu0 0.0
      %2017 = vmatprep.subr.mxu0 0.0
      %2018 = vmatpush1.msra.mxu0 0.0
      %2019 = vmatprep.subr.mxu0 0.0
      %2020 = vmatpush1.msra.mxu0 0.0
      %2021 = vmatprep.subr.mxu0 0.0
      %2022 = vmatpush1.msra.mxu0 0.0
      %2023 = vmatprep.subr.mxu0 0.0
      %2024 = vmatpush1.msra.mxu0 0.0
      %2025 = vmatprep.subr.mxu0 0.0
      %2026 = vmatpush1.msra.mxu0 0.0
      %2027 = vmatprep.subr.mxu0 %v1690
      %2028 = vmatpush1.msra.mxu0 %v1689
      %2029 = vmatprep.subr.mxu0 %v1688
      %2030 = vmatpush1.msra.mxu0 %v1687
      %2031 = vmatprep.subr.mxu0 %v1686
      %2032 = vmatpush1.msra.mxu0 %v1685
      %2033 = vmatprep.subr.mxu0 %v1684
      %2034 = vmatpush1.msra.mxu0 %v1683
      %2035 = vmatprep.subr.mxu0 %v1682
      %2036 = vmatpush1.msra.mxu0 %v1681
      %2037 = vmatprep.subr.mxu0 %v1680
      %2038 = vmatpush1.msra.mxu0 %v1679
      %2039 = vmatprep.subr.mxu0 %v1678
      %2040 = vmatpush1.msra.mxu0 %v1677
      %2041 = vmatprep.subr.mxu0 %v1676
      %2042 = vmatpush1.msra.mxu0 %v1675
      %2043 = vmatprep.subr.mxu0 0.0
      %2044 = vmatpush2.msra.mxu0 0.0
      %2045 = vmatprep.subr.mxu0 0.0
      %2046 = vmatpush2.msra.mxu0 0.0
      %2047 = vmatprep.subr.mxu0 0.0
      %2048 = vmatpush2.msra.mxu0 0.0
      %2049 = vmatprep.subr.mxu0 0.0
      %2050 = vmatpush2.msra.mxu0 0.0
      %2051 = vmatprep.subr.mxu0 0.0
      %2052 = vmatpush2.msra.mxu0 0.0
      %2053 = vmatprep.subr.mxu0 0.0
      %2054 = vmatpush2.msra.mxu0 0.0
      %2055 = vmatprep.subr.mxu0 0.0
      %2056 = vmatpush2.msra.mxu0 0.0
      %2057 = vmatprep.subr.mxu0 0.0
      %2058 = vmatpush2.msra.mxu0 0.0
      %2059 = vmatprep.subr.mxu0 0.0
      %2060 = vmatpush2.msra.mxu0 0.0
      %2061 = vmatprep.subr.mxu0 0.0
      %2062 = vmatpush2.msra.mxu0 0.0
      %2063 = vmatprep.subr.mxu0 0.0
      %2064 = vmatpush2.msra.mxu0 0.0
      %2065 = vmatprep.subr.mxu0 0.0
      %2066 = vmatpush2.msra.mxu0 0.0
      %2067 = vmatprep.subr.mxu0 0.0
      %2068 = vmatpush2.msra.mxu0 0.0
      %2069 = vmatprep.subr.mxu0 0.0
      %2070 = vmatpush2.msra.mxu0 0.0
      %2071 = vmatprep.subr.mxu0 0.0
      %2072 = vmatpush2.msra.mxu0 0.0
      %2073 = vmatprep.subr.mxu0 0.0
      %2074 = vmatpush2.msra.mxu0 0.0
      %2075 = vmatprep.mubr.f32.mxu0 0.0
      %2076 = vmatmul.mubr.f32.gmra.mxu0 %v1916
      %v2077 = vpop.f32.mrf.mxu0
      %v2078 = vadd.f32 %v1758, %v2077
      %v2079 = vpop.f32.mrf.mxu0
      %v2080 = vadd.f32 %v1758, %v2079
      %2081 = vmatprep.mubr.f32.mxu0 0.0
      %2082 = vmatmul.mubr.f32.gmra.mxu0 %v1919
      %v2083 = vpop.f32.mrf.mxu0
      %v2084 = vadd.f32 %v1763, %v2083
      %v2085 = vpop.f32.mrf.mxu0
      %v2086 = vadd.f32 %v1763, %v2085
      %2087 = vmatprep.mubr.f32.mxu0 0.0
      %2088 = vmatmul.mubr.f32.gmra.mxu0 %v1922
      %v2089 = vpop.f32.mrf.mxu0
      %v2090 = vadd.f32 %v1768, %v2089
      %v2091 = vpop.f32.mrf.mxu0
      %v2092 = vadd.f32 %v1768, %v2091
      %2093 = vmatprep.mubr.f32.mxu0 0.0
      %2094 = vmatmul.mubr.f32.gmra.mxu0 %v1925
      %v2095 = vpop.f32.mrf.mxu0
      %v2096 = vadd.f32 %v1773, %v2095
      %v2097 = vpop.f32.mrf.mxu0
      %v2098 = vadd.f32 %v1773, %v2097
      %2099 = vmatprep.mubr.f32.mxu0 0.0
      %2100 = vmatmul.mubr.f32.gmra.mxu0 %v1928
      %v2101 = vpop.f32.mrf.mxu0
      %v2102 = vadd.f32 %v1778, %v2101
      %v2103 = vpop.f32.mrf.mxu0
      %v2104 = vadd.f32 %v1778, %v2103
      %2105 = vmatprep.mubr.f32.mxu0 0.0
      %2106 = vmatmul.mubr.f32.gmra.mxu0 %v1931
      %v2107 = vpop.f32.mrf.mxu0
      %v2108 = vadd.f32 %v1783, %v2107
      %v2109 = vpop.f32.mrf.mxu0
      %v2110 = vadd.f32 %v1783, %v2109
      %2111 = vmatprep.mubr.f32.mxu0 0.0
      %2112 = vmatmul.mubr.f32.gmra.mxu0 %v1934
      %v2113 = vpop.f32.mrf.mxu0
      %v2114 = vadd.f32 %v1788, %v2113
      %v2115 = vpop.f32.mrf.mxu0
      %v2116 = vadd.f32 %v1788, %v2115
      %2117 = vmatprep.mubr.f32.mxu0 0.0
      %2118 = vmatmul.mubr.f32.gmra.mxu0 %v1937
      %v2119 = vpop.f32.mrf.mxu0
      %v2120 = vadd.f32 %v1793, %v2119
      %v2121 = vpop.f32.mrf.mxu0
      %v2122 = vadd.f32 %v1793, %v2121
      %2123 = vmatprep.mubr.f32.mxu0 0.0
      %2124 = vmatmul.mubr.f32.gmra.mxu0 %v1940
      %v2125 = vpop.f32.mrf.mxu0
      %v2126 = vadd.f32 %v1798, %v2125
      %v2127 = vpop.f32.mrf.mxu0
      %v2128 = vadd.f32 %v1798, %v2127
      %2129 = vmatprep.mubr.f32.mxu0 0.0
      %2130 = vmatmul.mubr.f32.gmra.mxu0 %v1943
      %v2131 = vpop.f32.mrf.mxu0
      %v2132 = vadd.f32 %v1803, %v2131
      %v2133 = vpop.f32.mrf.mxu0
      %v2134 = vadd.f32 %v1803, %v2133
      %2135 = vmatprep.mubr.f32.mxu0 0.0
      %2136 = vmatmul.mubr.f32.gmra.mxu0 %v1946
      %v2137 = vpop.f32.mrf.mxu0
      %v2138 = vadd.f32 %v1808, %v2137
      %v2139 = vpop.f32.mrf.mxu0
      %v2140 = vadd.f32 %v1808, %v2139
      %2141 = vmatprep.mubr.f32.mxu0 0.0
      %2142 = vmatmul.mubr.f32.gmra.mxu0 %v1949
      %v2143 = vpop.f32.mrf.mxu0
      %v2144 = vadd.f32 %v1813, %v2143
      %v2145 = vpop.f32.mrf.mxu0
      %v2146 = vadd.f32 %v1813, %v2145
      %2147 = vmatprep.mubr.f32.mxu0 0.0
      %2148 = vmatmul.mubr.f32.gmra.mxu0 %v1952
      %v2149 = vpop.f32.mrf.mxu0
      %v2150 = vadd.f32 %v1818, %v2149
      %v2151 = vpop.f32.mrf.mxu0
      %v2152 = vadd.f32 %v1818, %v2151
      %2153 = vmatprep.mubr.f32.mxu0 0.0
      %2154 = vmatmul.mubr.f32.gmra.mxu0 %v1955
      %v2155 = vpop.f32.mrf.mxu0
      %v2156 = vadd.f32 %v1823, %v2155
      %v2157 = vpop.f32.mrf.mxu0
      %v2158 = vadd.f32 %v1823, %v2157
      %2159 = vmatprep.mubr.f32.mxu0 0.0
      %2160 = vmatmul.mubr.f32.gmra.mxu0 %v1958
      %v2161 = vpop.f32.mrf.mxu0
      %v2162 = vadd.f32 %v1828, %v2161
      %v2163 = vpop.f32.mrf.mxu0
      %v2164 = vadd.f32 %v1828, %v2163
      %2165 = vmatprep.mubr.f32.mxu0 0.0
      %2166 = vmatmul.mubr.f32.gmra.mxu0 %v1961
      %v2167 = vpop.f32.mrf.mxu0
      %v2168 = vadd.f32 %v1833, %v2167
      %v2169 = vpop.f32.mrf.mxu0
      %v2170 = vadd.f32 %v1833, %v2169
      %2171 = vmatprep.mubr.f32.mxu0 0.0
      %2172 = vmatmul.mubr.f32.gmra.mxu0 %v1964
      %v2173 = vpop.f32.mrf.mxu0
      %v2174 = vadd.f32 %v1838, %v2173
      %v2175 = vpop.f32.mrf.mxu0
      %v2176 = vadd.f32 %v1838, %v2175
      %2177 = vmatprep.mubr.f32.mxu0 0.0
      %2178 = vmatmul.mubr.f32.gmra.mxu0 %v1967
      %v2179 = vpop.f32.mrf.mxu0
      %v2180 = vadd.f32 %v1843, %v2179
      %v2181 = vpop.f32.mrf.mxu0
      %v2182 = vadd.f32 %v1843, %v2181
      %2183 = vmatprep.mubr.f32.mxu0 0.0
      %2184 = vmatmul.mubr.f32.gmra.mxu0 %v1970
      %v2185 = vpop.f32.mrf.mxu0
      %v2186 = vadd.f32 %v1848, %v2185
      %v2187 = vpop.f32.mrf.mxu0
      %v2188 = vadd.f32 %v1848, %v2187
      %2189 = vmatprep.mubr.f32.mxu0 0.0
      %2190 = vmatmul.mubr.f32.gmra.mxu0 %v1973
      %v2191 = vpop.f32.mrf.mxu0
      %v2192 = vadd.f32 %v1853, %v2191
      %v2193 = vpop.f32.mrf.mxu0
      %v2194 = vadd.f32 %v1853, %v2193
      %2195 = vmatprep.mubr.f32.mxu0 0.0
      %2196 = vmatmul.mubr.f32.gmra.mxu0 %v1976
      %v2197 = vpop.f32.mrf.mxu0
      %v2198 = vadd.f32 %v1858, %v2197
      %v2199 = vpop.f32.mrf.mxu0
      %v2200 = vadd.f32 %v1858, %v2199
      %2201 = vmatprep.mubr.f32.mxu0 0.0
      %2202 = vmatmul.mubr.f32.gmra.mxu0 %v1979
      %v2203 = vpop.f32.mrf.mxu0
      %v2204 = vadd.f32 %v1863, %v2203
      %v2205 = vpop.f32.mrf.mxu0
      %v2206 = vadd.f32 %v1863, %v2205
      %2207 = vmatprep.mubr.f32.mxu0 0.0
      %2208 = vmatmul.mubr.f32.gmra.mxu0 %v1982
      %v2209 = vpop.f32.mrf.mxu0
      %v2210 = vadd.f32 %v1868, %v2209
      %v2211 = vpop.f32.mrf.mxu0
      %v2212 = vadd.f32 %v1868, %v2211
      %2213 = vmatprep.mubr.f32.mxu0 0.0
      %2214 = vmatmul.mubr.f32.gmra.mxu0 %v1985
      %v2215 = vpop.f32.mrf.mxu0
      %v2216 = vadd.f32 %v1873, %v2215
      %v2217 = vpop.f32.mrf.mxu0
      %v2218 = vadd.f32 %v1873, %v2217
      %2219 = vmatprep.mubr.f32.mxu0 0.0
      %2220 = vmatmul.mubr.f32.gmra.mxu0 %v1988
      %v2221 = vpop.f32.mrf.mxu0
      %v2222 = vadd.f32 %v1878, %v2221
      %v2223 = vpop.f32.mrf.mxu0
      %v2224 = vadd.f32 %v1878, %v2223
      %2225 = vmatprep.mubr.f32.mxu0 0.0
      %2226 = vmatmul.mubr.f32.gmra.mxu0 %v1991
      %v2227 = vpop.f32.mrf.mxu0
      %v2228 = vadd.f32 %v1883, %v2227
      %v2229 = vpop.f32.mrf.mxu0
      %v2230 = vadd.f32 %v1883, %v2229
      %2231 = vmatprep.mubr.f32.mxu0 0.0
      %2232 = vmatmul.mubr.f32.gmra.mxu0 %v1994
      %v2233 = vpop.f32.mrf.mxu0
      %v2234 = vadd.f32 %v1888, %v2233
      %v2235 = vpop.f32.mrf.mxu0
      %v2236 = vadd.f32 %v1888, %v2235
      %2237 = vmatprep.mubr.f32.mxu0 0.0
      %2238 = vmatmul.mubr.f32.gmra.mxu0 %v1997
      %v2239 = vpop.f32.mrf.mxu0
      %v2240 = vadd.f32 %v1893, %v2239
      %v2241 = vpop.f32.mrf.mxu0
      %v2242 = vadd.f32 %v1893, %v2241
      %2243 = vmatprep.mubr.f32.mxu0 0.0
      %2244 = vmatmul.mubr.f32.gmra.mxu0 %v2000
      %v2245 = vpop.f32.mrf.mxu0
      %v2246 = vadd.f32 %v1898, %v2245
      %v2247 = vpop.f32.mrf.mxu0
      %v2248 = vadd.f32 %v1898, %v2247
      %2249 = vmatprep.mubr.f32.mxu0 0.0
      %2250 = vmatmul.mubr.f32.gmra.mxu0 %v2003
      %v2251 = vpop.f32.mrf.mxu0
      %v2252 = vadd.f32 %v1903, %v2251
      %v2253 = vpop.f32.mrf.mxu0
      %v2254 = vadd.f32 %v1903, %v2253
      %2255 = vmatprep.mubr.f32.mxu0 0.0
      %2256 = vmatmul.mubr.f32.gmra.mxu0 %v2006
      %v2257 = vpop.f32.mrf.mxu0
      %v2258 = vadd.f32 %v1908, %v2257
      %v2259 = vpop.f32.mrf.mxu0
      %v2260 = vadd.f32 %v1908, %v2259
      %2261 = vmatprep.mubr.f32.mxu0 0.0
      %2262 = vmatmul.mubr.f32.gmra.mxu0 %v2009
      %v2263 = vpop.f32.mrf.mxu0
      %v2264 = vadd.f32 %v1913, %v2263
      %v2265 = vpop.f32.mrf.mxu0
      %v2266 = vadd.f32 %v1913, %v2265
      %2267 = vdwg.mxu0
      %2268 = vst [vmem:[%s316] sm:$0xff] %v2078
      %2269 = vst [vmem:[%s316 + $0x8] sm:$0xff] %v2080
      %2270 = vst [vmem:[%s316 + $0x10] sm:$0xff] %v2084
      %2271 = vst [vmem:[%s316 + $0x18] sm:$0xff] %v2086
      %2272 = vst [vmem:[%s316 + $0x20] sm:$0xff] %v2090
      %2273 = vst [vmem:[%s316 + $0x28] sm:$0xff] %v2092
      %2274 = vst [vmem:[%s316 + $0x30] sm:$0xff] %v2096
      %2275 = vst [vmem:[%s316 + $0x38] sm:$0xff] %v2098
      %2276 = vst [vmem:[%s316 + $0x40] sm:$0xff] %v2102
      %2277 = vst [vmem:[%s316 + $0x48] sm:$0xff] %v2104
      %2278 = vst [vmem:[%s316 + $0x50] sm:$0xff] %v2108
      %2279 = vst [vmem:[%s316 + $0x58] sm:$0xff] %v2110
      %2280 = vst [vmem:[%s316 + $0x60] sm:$0xff] %v2114
      %2281 = vst [vmem:[%s316 + $0x68] sm:$0xff] %v2116
      %2282 = vst [vmem:[%s316 + $0x70] sm:$0xff] %v2120
      %2283 = vst [vmem:[%s316 + $0x78] sm:$0xff] %v2122
      %2284 = vst [vmem:[%s316 + $0x80] sm:$0xff] %v2126
      %2285 = vst [vmem:[%s316 + $0x88] sm:$0xff] %v2128
      %2286 = vst [vmem:[%s316 + $0x90] sm:$0xff] %v2132
      %2287 = vst [vmem:[%s316 + $0x98] sm:$0xff] %v2134
      %2288 = vst [vmem:[%s316 + $0xa0] sm:$0xff] %v2138
      %2289 = vst [vmem:[%s316 + $0xa8] sm:$0xff] %v2140
      %2290 = vst [vmem:[%s316 + $0xb0] sm:$0xff] %v2144
      %2291 = vst [vmem:[%s316 + $0xb8] sm:$0xff] %v2146
      %2292 = vst [vmem:[%s316 + $0xc0] sm:$0xff] %v2150
      %2293 = vst [vmem:[%s316 + $0xc8] sm:$0xff] %v2152
      %2294 = vst [vmem:[%s316 + $0xd0] sm:$0xff] %v2156
      %2295 = vst [vmem:[%s316 + $0xd8] sm:$0xff] %v2158
      %2296 = vst [vmem:[%s316 + $0xe0] sm:$0xff] %v2162
      %2297 = vst [vmem:[%s316 + $0xe8] sm:$0xff] %v2164
      %2298 = vst [vmem:[%s316 + $0xf0] sm:$0xff] %v2168
      %2299 = vst [vmem:[%s316 + $0xf8] sm:$0xff] %v2170
      %2300 = vst [vmem:[%s316 + $0x100] sm:$0xff] %v2174
      %2301 = vst [vmem:[%s316 + $0x108] sm:$0xff] %v2176
      %2302 = vst [vmem:[%s316 + $0x110] sm:$0xff] %v2180
      %2303 = vst [vmem:[%s316 + $0x118] sm:$0xff] %v2182
      %2304 = vst [vmem:[%s316 + $0x120] sm:$0xff] %v2186
      %2305 = vst [vmem:[%s316 + $0x128] sm:$0xff] %v2188
      %2306 = vst [vmem:[%s316 + $0x130] sm:$0xff] %v2192
      %2307 = vst [vmem:[%s316 + $0x138] sm:$0xff] %v2194
      %2308 = vst [vmem:[%s316 + $0x140] sm:$0xff] %v2198
      %2309 = vst [vmem:[%s316 + $0x148] sm:$0xff] %v2200
      %2310 = vst [vmem:[%s316 + $0x150] sm:$0xff] %v2204
      %2311 = vst [vmem:[%s316 + $0x158] sm:$0xff] %v2206
      %2312 = vst [vmem:[%s316 + $0x160] sm:$0xff] %v2210
      %2313 = vst [vmem:[%s316 + $0x168] sm:$0xff] %v2212
      %2314 = vst [vmem:[%s316 + $0x170] sm:$0xff] %v2216
      %2315 = vst [vmem:[%s316 + $0x178] sm:$0xff] %v2218
      %2316 = vst [vmem:[%s316 + $0x180] sm:$0xff] %v2222
      %2317 = vst [vmem:[%s316 + $0x188] sm:$0xff] %v2224
      %2318 = vst [vmem:[%s316 + $0x190] sm:$0xff] %v2228
      %2319 = vst [vmem:[%s316 + $0x198] sm:$0xff] %v2230
      %2320 = vst [vmem:[%s316 + $0x1a0] sm:$0xff] %v2234
      %2321 = vst [vmem:[%s316 + $0x1a8] sm:$0xff] %v2236
      %2322 = vst [vmem:[%s316 + $0x1b0] sm:$0xff] %v2240
      %2323 = vst [vmem:[%s316 + $0x1b8] sm:$0xff] %v2242
      %2324 = vst [vmem:[%s316 + $0x1c0] sm:$0xff] %v2246
      %2325 = vst [vmem:[%s316 + $0x1c8] sm:$0xff] %v2248
      %2326 = vst [vmem:[%s316 + $0x1d0] sm:$0xff] %v2252
      %2327 = vst [vmem:[%s316 + $0x1d8] sm:$0xff] %v2254
      %2328 = vst [vmem:[%s316 + $0x1e0] sm:$0xff] %v2258
      %2329 = vst [vmem:[%s316 + $0x1e8] sm:$0xff] %v2260
      %2330 = vst [vmem:[%s316 + $0x1f0] sm:$0xff] %v2264
      %2331 = vst [vmem:[%s316 + $0x1f8] sm:$0xff] %v2266
      %s2332 = smul.u32 2, %s23
      %p2333 = scmp.lt.s32.totalorder %s22, 1
      %s2334 = scalar_select %p2333, %s22, 1
      %p2335 = scmp.lt.s32.totalorder %s2332, 1
      %s2336 = scalar_select %p2335, %s2332, 1
      %s2337 = smul.addr %s2334, 64
      %s2338 = sadd.s32 %s2336, %s2337
      %s2339 = smul.addr %s2338, 8
      %s2340 = scalar_lea.vmem %s7, %s2339
      // Predicated region
      $region49: #{refine3l_forward.1} parent=47 // pred_check
        %p2341 = pneg %p204
      $region50: #{refine3l_forward.1} parent=47 // pred_check_branch
        %2343 = sbr.rel (%p2341) target = $region52
      $region51: #{refine3l_forward.1} parent=47 // pred_region
        %s2344 = smul.u32 2, %s23
      $region52: #{refine3l_forward.1} parent=47 // pred_fallthru
        _
    $region48: #{refine3l_forward.1} parent=5 // pred_fallthru
      _
    %p2345 = scmp.le.s32.totalorder 2, %s13
    // Predicated region
    $region53: #{refine3l_forward.1} parent=5 // pred_check
      %p2346 = pneg %p2345
    $region54: #{refine3l_forward.1} parent=5 // pred_check_branch
      %2348 = sbr.rel (%p2346) target = $region56
    $region55: #{refine3l_forward.1} parent=5 // pred_region
      %s2349 = ssub.s32 %s13, 2
      // Predicated region
      $region57: #{refine3l_forward.1} parent=55 // pred_check
        %p2350 = pneg %p210
      $region58: #{refine3l_forward.1} parent=55 // pred_check_branch
        %2352 = sbr.rel (%p2350) target = $region60
      $region59: #{refine3l_forward.1} parent=55 // pred_region
        %s2353 = smul.u32 2, %s25
        %p2354 = scmp.lt.s32.totalorder %s24, 1
        %s2355 = scalar_select %p2354, %s24, 1
        %p2356 = scmp.lt.s32.totalorder %s2353, 1
        %s2357 = scalar_select %p2356, %s2353, 1
        %s2358 = smul.addr %s2355, 64
        %s2359 = sadd.s32 %s2357, %s2358
        %s2360 = smul.addr %s2359, 8
        %s2361 = scalar_lea.vmem %s7, %s2360
      $region60: #{refine3l_forward.1} parent=55 // pred_fallthru
        _
    $region56: #{refine3l_forward.1} parent=5 // pred_fallthru
      _
  $region6: #{refine3l_forward.1} parent=0 // loop_footer
    %s17 = sadd.s32 1, %s13
  $region7: #{refine3l_forward.1} parent=0 // loop_footer_branch
    %12 = sbr.rel target = $region3
  $region8: #{refine3l_forward.1} parent=0 // loop_exit
    _

</llo_original>
